<compile_context>
chip_gen: v7x
topology: tpu7x:2x2x1
jax: 0.10.0
libtpu: 0.0.40
codegen_flags: <defaults>
</compile_context>

<pallas_src>
import functools
import math

import jax
import jax.numpy as jnp
from jax.experimental import pallas as pl
from jax.experimental.pallas import tpu as pltpu

LRELU_SLOPE = 0.2
BN_EPS = 1e-5
CPAD = 128           # lane-dense padded output channels for conv blocks
HEAD_PAD = 128       # lane-dense padded head output columns
_BLOCK_COUT = (16, 32, 64, 128)   # static architecture constants
_VMEM_LIMIT = 32 * 1024 * 1024    # explicit scoped-VMEM request (safe on v5e/v6e/v7x)


def _round_up(x, m):
    return (x + m - 1) // m * m


# ----------------------------------------------------------------------------
# Pallas kernels
# ----------------------------------------------------------------------------
def _conv_block_kernel(p_ref, w_ref, b_ref, s_ref, t_ref, o_ref):
    """Fused im2col-matmul conv + bias + LeakyReLU + folded eval-BN (scale/shift).

    p_ref: (TILE_M, K) bf16 patch tile, K = 9*Cin
    w_ref: (K, CPAD)   bf16 weight (Cout padded to 128 lanes with zeros)
    b_ref/s_ref/t_ref: (1, CPAD) f32 bias / BN-scale / BN-shift
    o_ref: (TILE_M, CPAD) bf16
    """
    acc = jnp.dot(p_ref[...], w_ref[...], preferred_element_type=jnp.float32)
    acc = acc + b_ref[...]
    acc = jnp.where(acc >= 0.0, acc, LRELU_SLOPE * acc)       # LeakyReLU(0.2)
    # TODO(synk): Dropout2d(0.25) is identity in eval mode; train-mode
    # per-channel dropout is not implemented here.
    acc = acc * s_ref[...] + t_ref[...]                        # folded eval BN
    o_ref[...] = acc.astype(o_ref.dtype)


def _head_kernel(x_ref, w_ref, b_ref, o_ref, *, n_classes):
    """Both heads in one padded matmul: col 0 = sigmoid(adv),
    cols 1..1+n_classes = softmax(aux). Remaining padded columns = 0.
    Lane-dense: everything is computed/stored on the full 128-wide tile
    using column masks (no lane slicing)."""
    y = jnp.dot(x_ref[...], w_ref[...], preferred_element_type=jnp.float32)
    y = y + b_ref[...]
    col = jax.lax.broadcasted_iota(jnp.int32, y.shape, 1)
    is_adv = col == 0
    is_aux = (col >= 1) & (col < 1 + n_classes)

    sig = 1.0 / (1.0 + jnp.exp(-y))

    neg_inf = jnp.float32(-jnp.inf)
    m = jnp.max(jnp.where(is_aux, y, neg_inf), axis=-1, keepdims=True)
    e = jnp.where(is_aux, jnp.exp(y - m), 0.0)
    sm = e / jnp.sum(e, axis=-1, keepdims=True)

    out = jnp.where(is_adv, sig, jnp.where(is_aux, sm, 0.0))
    o_ref[...] = out.astype(o_ref.dtype)


# ----------------------------------------------------------------------------
# JAX glue: im2col + pallas_call wrappers
# ----------------------------------------------------------------------------
def _im2col_s2p1k3(x_nhwc):
    """Extract 3x3 / stride 2 / pad 1 patches (bf16). Row order = (ky, kx, cin).

    TODO(synk): patch formation inside the kernel (reading the padded NHWC
    input directly) would avoid materializing the 9x-inflated patch matrix in
    HBM; here we only mitigate it by emitting patches in bf16.
    """
    N, H, W, C = x_nhwc.shape
    Ho = (H + 2 - 3) // 2 + 1
    Wo = (W + 2 - 3) // 2 + 1
    xp = jnp.pad(x_nhwc, ((0, 0), (1, 1), (1, 1), (0, 0)))
    cols = []
    for ky in range(3):
        for kx in range(3):
            cols.append(xp[:, ky:ky + 2 * (Ho - 1) + 1:2,
                           kx:kx + 2 * (Wo - 1) + 1:2, :])
    patches = jnp.stack(cols, axis=3)                # (N, Ho, Wo, 9, C)
    return patches.reshape(N * Ho * Wo, 9 * C), Ho, Wo


def conv_block(x_nhwc, blk, cout):
    N, H, W, Cin = x_nhwc.shape
    patches, Ho, Wo = _im2col_s2p1k3(x_nhwc)          # (M, 9*Cin) bf16
    M = N * Ho * Wo
    K = 9 * Cin

    # M-axis tiling: big-enough tiles for pipelining, padded to a multiple of 8.
    tile_m = min(512, _round_up(M, 8))
    m_pad = _round_up(M, tile_m)
    if m_pad != M:
        patches = jnp.pad(patches, ((0, m_pad - M), (0, 0)))
    grid = (m_pad // tile_m,)

    out = pl.pallas_call(
        _conv_block_kernel,
        out_shape=jax.ShapeDtypeStruct((m_pad, CPAD), jnp.bfloat16),
        grid=grid,
        in_specs=[
            pl.BlockSpec((tile_m, K), lambda i: (i, 0)),     # patch tile
            pl.BlockSpec((K, CPAD), lambda i: (0, 0)),       # weights (resident)
            pl.BlockSpec((1, CPAD), lambda i: (0, 0)),       # bias
            pl.BlockSpec((1, CPAD), lambda i: (0, 0)),       # BN scale
            pl.BlockSpec((1, CPAD), lambda i: (0, 0)),       # BN shift
        ],
        out_specs=pl.BlockSpec((tile_m, CPAD), lambda i: (i, 0)),
        compiler_params=pltpu.CompilerParams(
            dimension_semantics=("parallel",),
            vmem_limit_bytes=_VMEM_LIMIT),
    )(patches, blk["w"], blk["b"], blk["scale"], blk["shift"])

    # Strip row padding + lane padding; keep activations in bf16.
    return out[:M, :cout].reshape(N, Ho, Wo, cout)


def heads(x_flat, w_heads, b_heads, n_classes):
    N, F = x_flat.shape
    tile_n = min(256, _round_up(N, 8))
    n_pad = _round_up(N, tile_n)
    if n_pad != N:
        x_flat = jnp.pad(x_flat, ((0, n_pad - N), (0, 0)))
    grid = (n_pad // tile_n,)

    out = pl.pallas_call(
        functools.partial(_head_kernel, n_classes=n_classes),
        out_shape=jax.ShapeDtypeStruct((n_pad, HEAD_PAD), jnp.float32),
        grid=grid,
        in_specs=[
            pl.BlockSpec((tile_n, F), lambda i: (i, 0)),
            pl.BlockSpec((F, HEAD_PAD), lambda i: (0, 0)),
            pl.BlockSpec((1, HEAD_PAD), lambda i: (0, 0)),
        ],
        out_specs=pl.BlockSpec((tile_n, HEAD_PAD), lambda i: (i, 0)),
        compiler_params=pltpu.CompilerParams(
            dimension_semantics=("parallel",),
            vmem_limit_bytes=_VMEM_LIMIT),
    )(x_flat, w_heads, b_heads)

    adv = out[:N, 0:1]
    aux = out[:N, 1:1 + n_classes]
    return adv, aux


# ----------------------------------------------------------------------------
# Parameter construction (PyTorch layout) + kernel-layout preparation
# ----------------------------------------------------------------------------
def init_torch_params(key, n_classes, image_shape):
    """Deterministic params mirroring the PyTorch module's tensor layouts."""
    c, h, w = image_shape
    chans = [c, 16, 32, 64, 128]
    downed = int(math.ceil(h / 2 ** 4))
    flat = 128 * downed ** 2

    keys = jax.random.split(key, 16)
    params = {"blocks": []}
    ki = 0
    for i in range(4):
        cin, cout = chans[i], chans[i + 1]
        wconv = 0.05 * jax.random.normal(keys[ki], (cout, cin, 3, 3), jnp.float32); ki += 1
        bconv = 0.05 * jax.random.normal(keys[ki], (cout,), jnp.float32); ki += 1
        bn = (jnp.ones((cout,), jnp.float32),    # gamma
              jnp.zeros((cout,), jnp.float32),   # beta
              jnp.zeros((cout,), jnp.float32),   # running_mean
              jnp.ones((cout,), jnp.float32))    # running_var
        params["blocks"].append(dict(w=wconv, b=bconv, bn=bn, use_bn=(i != 0)))

    params["w_adv"] = 0.05 * jax.random.normal(keys[ki], (1, flat), jnp.float32); ki += 1
    params["b_adv"] = jnp.zeros((1,), jnp.float32)
    params["w_aux"] = 0.05 * jax.random.normal(keys[ki], (n_classes, flat), jnp.float32); ki += 1
    params["b_aux"] = jnp.zeros((n_classes,), jnp.float32)
    return params


def prepare_params(tp, n_classes, image_shape):
    """One-time (outside jit) layout plumbing:
      * conv weights -> (9*Cin, CPAD) bf16, bias/scale/shift padded to 128 lanes
      * eval BatchNorm folded to scale = gamma*rsqrt(var+eps), shift = beta - mu*scale
      * head weights concatenated, row-permuted from NCHW to NHWC flatten order,
        transposed and zero-padded to (F, 128) bf16.
    Resulting pytree contains only arrays (safe to pass through jit)."""
    c, h, w = image_shape
    d = int(math.ceil(h / 2 ** 4))

    kp = {"blocks": []}
    for blk in tp["blocks"]:
        wconv = blk["w"]                                   # (Cout, Cin, 3, 3)
        cout, cin = int(wconv.shape[0]), int(wconv.shape[1])
        wmat = jnp.transpose(wconv, (2, 3, 1, 0)).reshape(9 * cin, cout)
        wmat = jnp.pad(wmat, ((0, 0), (0, CPAD - cout))).astype(jnp.bfloat16)
        bias = jnp.pad(blk["b"], (0, CPAD - cout)).reshape(1, CPAD).astype(jnp.float32)

        if blk["use_bn"]:
            gamma, beta, mu, var = blk["bn"]
            scale = gamma * jax.lax.rsqrt(var + BN_EPS)
            shift = beta - mu * scale
        else:
            scale = jnp.ones((cout,), jnp.float32)
            shift = jnp.zeros((cout,), jnp.float32)
        scale = jnp.pad(scale, (0, CPAD - cout)).reshape(1, CPAD).astype(jnp.float32)
        shift = jnp.pad(shift, (0, CPAD - cout)).reshape(1, CPAD).astype(jnp.float32)

        kp["blocks"].append({"w": wmat, "b": bias, "scale": scale, "shift": shift})

    # Heads: permute rows NCHW -> NHWC flatten order, fuse adv+aux, pad to 128.
    F = 128 * d * d
    w_adv = tp["w_adv"].reshape(1, 128, d, d).transpose(0, 2, 3, 1).reshape(1, F)
    w_aux = tp["w_aux"].reshape(n_classes, 128, d, d).transpose(0, 2, 3, 1).reshape(n_classes, F)
    wh = jnp.zeros((F, HEAD_PAD), jnp.float32)
    wh = wh.at[:, 0].set(w_adv[0]).at[:, 1:1 + n_classes].set(w_aux.T)
    bh = jnp.zeros((1, HEAD_PAD), jnp.float32)
    bh = bh.at[0, 0].set(tp["b_adv"][0]).at[0, 1:1 + n_classes].set(tp["b_aux"])

    kp["w_heads"] = wh.astype(jnp.bfloat16)
    kp["b_heads"] = bh
    return kp


# ----------------------------------------------------------------------------
# Forward pass
# ----------------------------------------------------------------------------
def discriminator_forward(params, img_nchw, *, n_classes):
    # NCHW (PyTorch) -> NHWC (kernel-internal layout), bf16 activations.
    x = jnp.transpose(img_nchw, (0, 2, 3, 1)).astype(jnp.bfloat16)
    for blk, cout in zip(params["blocks"], _BLOCK_COUT):
        x = conv_block(x, blk, cout)
    # Flatten in NHWC order; head weights were pre-permuted to match, so the
    # PyTorch View((-1, 128*d*d)) NCHW flatten needs no runtime transpose.
    x = x.reshape(x.shape[0], -1)
    adv, aux = heads(x, params["w_heads"], params["b_heads"], n_classes)
    return adv, aux


if __name__ == "__main__":
    key = jax.random.PRNGKey(0)
    k_param, k_img = jax.random.split(key)

    n_classes = 5
    image_shape = (4, 16, 16)       # (c, h, w)
    batch = 2

    torch_params = init_torch_params(k_param, n_classes, image_shape)
    kparams = prepare_params(torch_params, n_classes, image_shape)
    img = jax.random.normal(k_img, (batch,) + image_shape, jnp.float32)

    fwd = jax.jit(functools.partial(discriminator_forward, n_classes=n_classes))
    adv, aux = fwd(kparams, img)
    adv = jax.block_until_ready(adv)
    aux = jax.block_until_ready(aux)

    assert adv.shape == (batch, 1)
    assert aux.shape == (batch, n_classes)
    assert bool(jnp.all((adv > 0.0) & (adv < 1.0)))
    assert bool(jnp.allclose(jnp.sum(aux, axis=-1), 1.0, atol=1e-5))

    print("KERNEL_OK")
</pallas_src>

<mosaic_0001>
module attributes {stable_mosaic.version = 11 : i64} {
  func.func @_conv_block_kernel(%arg0: i32, %arg1: memref<128x36xbf16, #tpu.memory_space<vmem>>, %arg2: memref<36x128xbf16, #tpu.memory_space<vmem>>, %arg3: memref<1x128xf32, #tpu.memory_space<vmem>>, %arg4: memref<1x128xf32, #tpu.memory_space<vmem>>, %arg5: memref<1x128xf32, #tpu.memory_space<vmem>>, %arg6: memref<128x128xbf16, #tpu.memory_space<vmem>>) attributes {dimension_semantics = [#tpu.dimension_semantics<parallel>], iteration_bounds = array<i64: 1>, scalar_prefetch = 0 : i64, scratch_operands = 0 : i64, tpu.core_type = #tpu.core_type<tc>, window_params = [{transform_indices = @transform_0, window_bounds = array<i64: 128, 36>}, {pipeline_mode = #tpu.pipeline_mode<synchronous>, transform_indices = @transform_1, window_bounds = array<i64: 36, 128>}, {pipeline_mode = #tpu.pipeline_mode<synchronous>, transform_indices = @transform_2, window_bounds = array<i64: 1, 128>}, {pipeline_mode = #tpu.pipeline_mode<synchronous>, transform_indices = @transform_3, window_bounds = array<i64: 1, 128>}, {pipeline_mode = #tpu.pipeline_mode<synchronous>, transform_indices = @transform_4, window_bounds = array<i64: 1, 128>}, {transform_indices = @transform_5, window_bounds = array<i64: 128, 128>}]} {
    %c0 = arith.constant 0 : index
    %c0_0 = arith.constant 0 : index
    %0 = vector.load %arg1[%c0, %c0_0] : memref<128x36xbf16, #tpu.memory_space<vmem>>, vector<128x36xbf16>
    %c0_1 = arith.constant 0 : index
    %c0_2 = arith.constant 0 : index
    %1 = vector.load %arg2[%c0_1, %c0_2] : memref<36x128xbf16, #tpu.memory_space<vmem>>, vector<36x128xbf16>
    %cst = arith.constant dense<0.000000e+00> : vector<128x128xf32>
    %2 = tpu.matmul %0, %1, %cst {dimension_numbers = #tpu.dot_dimension_numbers<[1], [0], [0], [1], [0, 0, 1, 1], [], []>} : vector<128x36xbf16>, vector<36x128xbf16>, vector<128x128xf32> -> vector<128x128xf32>
    %c0_3 = arith.constant 0 : index
    %c0_4 = arith.constant 0 : index
    %3 = vector.load %arg3[%c0_3, %c0_4] : memref<1x128xf32, #tpu.memory_space<vmem>>, vector<1x128xf32>
    %4 = vector.broadcast %3 : vector<1x128xf32> to vector<128x128xf32>
    %5 = arith.addf %2, %4 : vector<128x128xf32>
    %cst_5 = arith.constant 0.000000e+00 : f32
    %6 = vector.broadcast %cst_5 : f32 to vector<128x128xf32>
    %7 = arith.cmpf oge, %5, %6 : vector<128x128xf32>
    %cst_6 = arith.constant 2.000000e-01 : f32
    %8 = vector.broadcast %cst_6 : f32 to vector<128x128xf32>
    %9 = arith.mulf %8, %5 : vector<128x128xf32>
    %10 = arith.select %7, %5, %9 : vector<128x128xi1>, vector<128x128xf32>
    %c0_7 = arith.constant 0 : index
    %c0_8 = arith.constant 0 : index
    %11 = vector.load %arg4[%c0_7, %c0_8] : memref<1x128xf32, #tpu.memory_space<vmem>>, vector<1x128xf32>
    %12 = vector.broadcast %11 : vector<1x128xf32> to vector<128x128xf32>
    %13 = arith.mulf %10, %12 : vector<128x128xf32>
    %c0_9 = arith.constant 0 : index
    %c0_10 = arith.constant 0 : index
    %14 = vector.load %arg5[%c0_9, %c0_10] : memref<1x128xf32, #tpu.memory_space<vmem>>, vector<1x128xf32>
    %15 = vector.broadcast %14 : vector<1x128xf32> to vector<128x128xf32>
    %16 = arith.addf %13, %15 : vector<128x128xf32>
    %17 = arith.truncf %16 : vector<128x128xf32> to vector<128x128xbf16>
    %c0_11 = arith.constant 0 : index
    %c0_12 = arith.constant 0 : index
    %18 = vector.load %arg6[%c0_11, %c0_12] : memref<128x128xbf16, #tpu.memory_space<vmem>>, vector<128x128xbf16>
    tpu.vector_store %arg6[%c0_11, %c0_12], %17 {strides = array<i32>} : memref<128x128xbf16, #tpu.memory_space<vmem>>, vector<128x128xbf16>,
    return
  }
  func.func @transform_0(%arg0: i32) -> (i32, i32) {
    %c0_i32 = arith.constant 0 : i32
    %c0_i32_0 = arith.constant 0 : i32
    return %arg0, %c0_i32 : i32, i32
  }
  func.func @transform_1(%arg0: i32) -> (i32, i32) {
    %c0_i32 = arith.constant 0 : i32
    %c0_i32_0 = arith.constant 0 : i32
    %c0_i32_1 = arith.constant 0 : i32
    return %c0_i32, %c0_i32_0 : i32, i32
  }
  func.func @transform_2(%arg0: i32) -> (i32, i32) {
    %c0_i32 = arith.constant 0 : i32
    %c0_i32_0 = arith.constant 0 : i32
    %c0_i32_1 = arith.constant 0 : i32
    return %c0_i32, %c0_i32_0 : i32, i32
  }
  func.func @transform_3(%arg0: i32) -> (i32, i32) {
    %c0_i32 = arith.constant 0 : i32
    %c0_i32_0 = arith.constant 0 : i32
    %c0_i32_1 = arith.constant 0 : i32
    return %c0_i32, %c0_i32_0 : i32, i32
  }
  func.func @transform_4(%arg0: i32) -> (i32, i32) {
    %c0_i32 = arith.constant 0 : i32
    %c0_i32_0 = arith.constant 0 : i32
    %c0_i32_1 = arith.constant 0 : i32
    return %c0_i32, %c0_i32_0 : i32, i32
  }
  func.func @transform_5(%arg0: i32) -> (i32, i32) {
    %c0_i32 = arith.constant 0 : i32
    %c0_i32_0 = arith.constant 0 : i32
    return %arg0, %c0_i32 : i32, i32
  }
}

module attributes {stable_mosaic.version = 11 : i64} {
  func.func @_conv_block_kernel(%arg0: i32, %arg1: memref<32x144xbf16, #tpu.memory_space<vmem>>, %arg2: memref<144x128xbf16, #tpu.memory_space<vmem>>, %arg3: memref<1x128xf32, #tpu.memory_space<vmem>>, %arg4: memref<1x128xf32, #tpu.memory_space<vmem>>, %arg5: memref<1x128xf32, #tpu.memory_space<vmem>>, %arg6: memref<32x128xbf16, #tpu.memory_space<vmem>>) attributes {dimension_semantics = [#tpu.dimension_semantics<parallel>], iteration_bounds = array<i64: 1>, scalar_prefetch = 0 : i64, scratch_operands = 0 : i64, tpu.core_type = #tpu.core_type<tc>, window_params = [{transform_indices = @transform_0, window_bounds = array<i64: 32, 144>}, {pipeline_mode = #tpu.pipeline_mode<synchronous>, transform_indices = @transform_1, window_bounds = array<i64: 144, 128>}, {pipeline_mode = #tpu.pipeline_mode<synchronous>, transform_indices = @transform_2, window_bounds = array<i64: 1, 128>}, {pipeline_mode = #tpu.pipeline_mode<synchronous>, transform_indices = @transform_3, window_bounds = array<i64: 1, 128>}, {pipeline_mode = #tpu.pipeline_mode<synchronous>, transform_indices = @transform_4, window_bounds = array<i64: 1, 128>}, {transform_indices = @transform_5, window_bounds = array<i64: 32, 128>}]} {
    %c0 = arith.constant 0 : index
    %c0_0 = arith.constant 0 : index
    %0 = vector.load %arg1[%c0, %c0_0] : memref<32x144xbf16, #tpu.memory_space<vmem>>, vector<32x144xbf16>
    %c0_1 = arith.constant 0 : index
    %c0_2 = arith.constant 0 : index
    %1 = vector.load %arg2[%c0_1, %c0_2] : memref<144x128xbf16, #tpu.memory_space<vmem>>, vector<144x128xbf16>
    %cst = arith.constant dense<0.000000e+00> : vector<32x128xf32>
    %2 = tpu.matmul %0, %1, %cst {dimension_numbers = #tpu.dot_dimension_numbers<[1], [0], [0], [1], [0, 0, 1, 1], [], []>} : vector<32x144xbf16>, vector<144x128xbf16>, vector<32x128xf32> -> vector<32x128xf32>
    %c0_3 = arith.constant 0 : index
    %c0_4 = arith.constant 0 : index
    %3 = vector.load %arg3[%c0_3, %c0_4] : memref<1x128xf32, #tpu.memory_space<vmem>>, vector<1x128xf32>
    %4 = vector.broadcast %3 : vector<1x128xf32> to vector<32x128xf32>
    %5 = arith.addf %2, %4 : vector<32x128xf32>
    %cst_5 = arith.constant 0.000000e+00 : f32
    %6 = vector.broadcast %cst_5 : f32 to vector<32x128xf32>
    %7 = arith.cmpf oge, %5, %6 : vector<32x128xf32>
    %cst_6 = arith.constant 2.000000e-01 : f32
    %8 = vector.broadcast %cst_6 : f32 to vector<32x128xf32>
    %9 = arith.mulf %8, %5 : vector<32x128xf32>
    %10 = arith.select %7, %5, %9 : vector<32x128xi1>, vector<32x128xf32>
    %c0_7 = arith.constant 0 : index
    %c0_8 = arith.constant 0 : index
    %11 = vector.load %arg4[%c0_7, %c0_8] : memref<1x128xf32, #tpu.memory_space<vmem>>, vector<1x128xf32>
    %12 = vector.broadcast %11 : vector<1x128xf32> to vector<32x128xf32>
    %13 = arith.mulf %10, %12 : vector<32x128xf32>
    %c0_9 = arith.constant 0 : index
    %c0_10 = arith.constant 0 : index
    %14 = vector.load %arg5[%c0_9, %c0_10] : memref<1x128xf32, #tpu.memory_space<vmem>>, vector<1x128xf32>
    %15 = vector.broadcast %14 : vector<1x128xf32> to vector<32x128xf32>
    %16 = arith.addf %13, %15 : vector<32x128xf32>
    %17 = arith.truncf %16 : vector<32x128xf32> to vector<32x128xbf16>
    %c0_11 = arith.constant 0 : index
    %c0_12 = arith.constant 0 : index
    %18 = vector.load %arg6[%c0_11, %c0_12] : memref<32x128xbf16, #tpu.memory_space<vmem>>, vector<32x128xbf16>
    tpu.vector_store %arg6[%c0_11, %c0_12], %17 {strides = array<i32>} : memref<32x128xbf16, #tpu.memory_space<vmem>>, vector<32x128xbf16>,
    return
  }
  func.func @transform_0(%arg0: i32) -> (i32, i32) {
    %c0_i32 = arith.constant 0 : i32
    %c0_i32_0 = arith.constant 0 : i32
    return %arg0, %c0_i32 : i32, i32
  }
  func.func @transform_1(%arg0: i32) -> (i32, i32) {
    %c0_i32 = arith.constant 0 : i32
    %c0_i32_0 = arith.constant 0 : i32
    %c0_i32_1 = arith.constant 0 : i32
    return %c0_i32, %c0_i32_0 : i32, i32
  }
  func.func @transform_2(%arg0: i32) -> (i32, i32) {
    %c0_i32 = arith.constant 0 : i32
    %c0_i32_0 = arith.constant 0 : i32
    %c0_i32_1 = arith.constant 0 : i32
    return %c0_i32, %c0_i32_0 : i32, i32
  }
  func.func @transform_3(%arg0: i32) -> (i32, i32) {
    %c0_i32 = arith.constant 0 : i32
    %c0_i32_0 = arith.constant 0 : i32
    %c0_i32_1 = arith.constant 0 : i32
    return %c0_i32, %c0_i32_0 : i32, i32
  }
  func.func @transform_4(%arg0: i32) -> (i32, i32) {
    %c0_i32 = arith.constant 0 : i32
    %c0_i32_0 = arith.constant 0 : i32
    %c0_i32_1 = arith.constant 0 : i32
    return %c0_i32, %c0_i32_0 : i32, i32
  }
  func.func @transform_5(%arg0: i32) -> (i32, i32) {
    %c0_i32 = arith.constant 0 : i32
    %c0_i32_0 = arith.constant 0 : i32
    return %arg0, %c0_i32 : i32, i32
  }
}

module attributes {stable_mosaic.version = 11 : i64} {
  func.func @_conv_block_kernel(%arg0: i32, %arg1: memref<8x288xbf16, #tpu.memory_space<vmem>>, %arg2: memref<288x128xbf16, #tpu.memory_space<vmem>>, %arg3: memref<1x128xf32, #tpu.memory_space<vmem>>, %arg4: memref<1x128xf32, #tpu.memory_space<vmem>>, %arg5: memref<1x128xf32, #tpu.memory_space<vmem>>, %arg6: memref<8x128xbf16, #tpu.memory_space<vmem>>) attributes {dimension_semantics = [#tpu.dimension_semantics<parallel>], iteration_bounds = array<i64: 1>, scalar_prefetch = 0 : i64, scratch_operands = 0 : i64, tpu.core_type = #tpu.core_type<tc>, window_params = [{transform_indices = @transform_0, window_bounds = array<i64: 8, 288>}, {pipeline_mode = #tpu.pipeline_mode<synchronous>, transform_indices = @transform_1, window_bounds = array<i64: 288, 128>}, {pipeline_mode = #tpu.pipeline_mode<synchronous>, transform_indices = @transform_2, window_bounds = array<i64: 1, 128>}, {pipeline_mode = #tpu.pipeline_mode<synchronous>, transform_indices = @transform_3, window_bounds = array<i64: 1, 128>}, {pipeline_mode = #tpu.pipeline_mode<synchronous>, transform_indices = @transform_4, window_bounds = array<i64: 1, 128>}, {transform_indices = @transform_5, window_bounds = array<i64: 8, 128>}]} {
    %c0 = arith.constant 0 : index
    %c0_0 = arith.constant 0 : index
    %0 = vector.load %arg1[%c0, %c0_0] : memref<8x288xbf16, #tpu.memory_space<vmem>>, vector<8x288xbf16>
    %c0_1 = arith.constant 0 : index
    %c0_2 = arith.constant 0 : index
    %1 = vector.load %arg2[%c0_1, %c0_2] : memref<288x128xbf16, #tpu.memory_space<vmem>>, vector<288x128xbf16>
    %cst = arith.constant dense<0.000000e+00> : vector<8x128xf32>
    %2 = tpu.matmul %0, %1, %cst {dimension_numbers = #tpu.dot_dimension_numbers<[1], [0], [0], [1], [0, 0, 1, 1], [], []>} : vector<8x288xbf16>, vector<288x128xbf16>, vector<8x128xf32> -> vector<8x128xf32>
    %c0_3 = arith.constant 0 : index
    %c0_4 = arith.constant 0 : index
    %3 = vector.load %arg3[%c0_3, %c0_4] : memref<1x128xf32, #tpu.memory_space<vmem>>, vector<1x128xf32>
    %4 = vector.broadcast %3 : vector<1x128xf32> to vector<8x128xf32>
    %5 = arith.addf %2, %4 : vector<8x128xf32>
    %cst_5 = arith.constant 0.000000e+00 : f32
    %6 = vector.broadcast %cst_5 : f32 to vector<8x128xf32>
    %7 = arith.cmpf oge, %5, %6 : vector<8x128xf32>
    %cst_6 = arith.constant 2.000000e-01 : f32
    %8 = vector.broadcast %cst_6 : f32 to vector<8x128xf32>
    %9 = arith.mulf %8, %5 : vector<8x128xf32>
    %10 = arith.select %7, %5, %9 : vector<8x128xi1>, vector<8x128xf32>
    %c0_7 = arith.constant 0 : index
    %c0_8 = arith.constant 0 : index
    %11 = vector.load %arg4[%c0_7, %c0_8] : memref<1x128xf32, #tpu.memory_space<vmem>>, vector<1x128xf32>
    %12 = vector.broadcast %11 : vector<1x128xf32> to vector<8x128xf32>
    %13 = arith.mulf %10, %12 : vector<8x128xf32>
    %c0_9 = arith.constant 0 : index
    %c0_10 = arith.constant 0 : index
    %14 = vector.load %arg5[%c0_9, %c0_10] : memref<1x128xf32, #tpu.memory_space<vmem>>, vector<1x128xf32>
    %15 = vector.broadcast %14 : vector<1x128xf32> to vector<8x128xf32>
    %16 = arith.addf %13, %15 : vector<8x128xf32>
    %17 = arith.truncf %16 : vector<8x128xf32> to vector<8x128xbf16>
    %c0_11 = arith.constant 0 : index
    %c0_12 = arith.constant 0 : index
    %18 = vector.load %arg6[%c0_11, %c0_12] : memref<8x128xbf16, #tpu.memory_space<vmem>>, vector<8x128xbf16>
    tpu.vector_store %arg6[%c0_11, %c0_12], %17 {strides = array<i32>} : memref<8x128xbf16, #tpu.memory_space<vmem>>, vector<8x128xbf16>,
    return
  }
  func.func @transform_0(%arg0: i32) -> (i32, i32) {
    %c0_i32 = arith.constant 0 : i32
    %c0_i32_0 = arith.constant 0 : i32
    return %arg0, %c0_i32 : i32, i32
  }
  func.func @transform_1(%arg0: i32) -> (i32, i32) {
    %c0_i32 = arith.constant 0 : i32
    %c0_i32_0 = arith.constant 0 : i32
    %c0_i32_1 = arith.constant 0 : i32
    return %c0_i32, %c0_i32_0 : i32, i32
  }
  func.func @transform_2(%arg0: i32) -> (i32, i32) {
    %c0_i32 = arith.constant 0 : i32
    %c0_i32_0 = arith.constant 0 : i32
    %c0_i32_1 = arith.constant 0 : i32
    return %c0_i32, %c0_i32_0 : i32, i32
  }
  func.func @transform_3(%arg0: i32) -> (i32, i32) {
    %c0_i32 = arith.constant 0 : i32
    %c0_i32_0 = arith.constant 0 : i32
    %c0_i32_1 = arith.constant 0 : i32
    return %c0_i32, %c0_i32_0 : i32, i32
  }
  func.func @transform_4(%arg0: i32) -> (i32, i32) {
    %c0_i32 = arith.constant 0 : i32
    %c0_i32_0 = arith.constant 0 : i32
    %c0_i32_1 = arith.constant 0 : i32
    return %c0_i32, %c0_i32_0 : i32, i32
  }
  func.func @transform_5(%arg0: i32) -> (i32, i32) {
    %c0_i32 = arith.constant 0 : i32
    %c0_i32_0 = arith.constant 0 : i32
    return %arg0, %c0_i32 : i32, i32
  }
}

module attributes {stable_mosaic.version = 11 : i64} {
  func.func @_conv_block_kernel(%arg0: i32, %arg1: memref<8x576xbf16, #tpu.memory_space<vmem>>, %arg2: memref<576x128xbf16, #tpu.memory_space<vmem>>, %arg3: memref<1x128xf32, #tpu.memory_space<vmem>>, %arg4: memref<1x128xf32, #tpu.memory_space<vmem>>, %arg5: memref<1x128xf32, #tpu.memory_space<vmem>>, %arg6: memref<8x128xbf16, #tpu.memory_space<vmem>>) attributes {dimension_semantics = [#tpu.dimension_semantics<parallel>], iteration_bounds = array<i64: 1>, scalar_prefetch = 0 : i64, scratch_operands = 0 : i64, tpu.core_type = #tpu.core_type<tc>, window_params = [{transform_indices = @transform_0, window_bounds = array<i64: 8, 576>}, {pipeline_mode = #tpu.pipeline_mode<synchronous>, transform_indices = @transform_1, window_bounds = array<i64: 576, 128>}, {pipeline_mode = #tpu.pipeline_mode<synchronous>, transform_indices = @transform_2, window_bounds = array<i64: 1, 128>}, {pipeline_mode = #tpu.pipeline_mode<synchronous>, transform_indices = @transform_3, window_bounds = array<i64: 1, 128>}, {pipeline_mode = #tpu.pipeline_mode<synchronous>, transform_indices = @transform_4, window_bounds = array<i64: 1, 128>}, {transform_indices = @transform_5, window_bounds = array<i64: 8, 128>}]} {
    %c0 = arith.constant 0 : index
    %c0_0 = arith.constant 0 : index
    %0 = vector.load %arg1[%c0, %c0_0] : memref<8x576xbf16, #tpu.memory_space<vmem>>, vector<8x576xbf16>
    %c0_1 = arith.constant 0 : index
    %c0_2 = arith.constant 0 : index
    %1 = vector.load %arg2[%c0_1, %c0_2] : memref<576x128xbf16, #tpu.memory_space<vmem>>, vector<576x128xbf16>
    %cst = arith.constant dense<0.000000e+00> : vector<8x128xf32>
    %2 = tpu.matmul %0, %1, %cst {dimension_numbers = #tpu.dot_dimension_numbers<[1], [0], [0], [1], [0, 0, 1, 1], [], []>} : vector<8x576xbf16>, vector<576x128xbf16>, vector<8x128xf32> -> vector<8x128xf32>
    %c0_3 = arith.constant 0 : index
    %c0_4 = arith.constant 0 : index
    %3 = vector.load %arg3[%c0_3, %c0_4] : memref<1x128xf32, #tpu.memory_space<vmem>>, vector<1x128xf32>
    %4 = vector.broadcast %3 : vector<1x128xf32> to vector<8x128xf32>
    %5 = arith.addf %2, %4 : vector<8x128xf32>
    %cst_5 = arith.constant 0.000000e+00 : f32
    %6 = vector.broadcast %cst_5 : f32 to vector<8x128xf32>
    %7 = arith.cmpf oge, %5, %6 : vector<8x128xf32>
    %cst_6 = arith.constant 2.000000e-01 : f32
    %8 = vector.broadcast %cst_6 : f32 to vector<8x128xf32>
    %9 = arith.mulf %8, %5 : vector<8x128xf32>
    %10 = arith.select %7, %5, %9 : vector<8x128xi1>, vector<8x128xf32>
    %c0_7 = arith.constant 0 : index
    %c0_8 = arith.constant 0 : index
    %11 = vector.load %arg4[%c0_7, %c0_8] : memref<1x128xf32, #tpu.memory_space<vmem>>, vector<1x128xf32>
    %12 = vector.broadcast %11 : vector<1x128xf32> to vector<8x128xf32>
    %13 = arith.mulf %10, %12 : vector<8x128xf32>
    %c0_9 = arith.constant 0 : index
    %c0_10 = arith.constant 0 : index
    %14 = vector.load %arg5[%c0_9, %c0_10] : memref<1x128xf32, #tpu.memory_space<vmem>>, vector<1x128xf32>
    %15 = vector.broadcast %14 : vector<1x128xf32> to vector<8x128xf32>
    %16 = arith.addf %13, %15 : vector<8x128xf32>
    %17 = arith.truncf %16 : vector<8x128xf32> to vector<8x128xbf16>
    %c0_11 = arith.constant 0 : index
    %c0_12 = arith.constant 0 : index
    %18 = vector.load %arg6[%c0_11, %c0_12] : memref<8x128xbf16, #tpu.memory_space<vmem>>, vector<8x128xbf16>
    tpu.vector_store %arg6[%c0_11, %c0_12], %17 {strides = array<i32>} : memref<8x128xbf16, #tpu.memory_space<vmem>>, vector<8x128xbf16>,
    return
  }
  func.func @transform_0(%arg0: i32) -> (i32, i32) {
    %c0_i32 = arith.constant 0 : i32
    %c0_i32_0 = arith.constant 0 : i32
    return %arg0, %c0_i32 : i32, i32
  }
  func.func @transform_1(%arg0: i32) -> (i32, i32) {
    %c0_i32 = arith.constant 0 : i32
    %c0_i32_0 = arith.constant 0 : i32
    %c0_i32_1 = arith.constant 0 : i32
    return %c0_i32, %c0_i32_0 : i32, i32
  }
  func.func @transform_2(%arg0: i32) -> (i32, i32) {
    %c0_i32 = arith.constant 0 : i32
    %c0_i32_0 = arith.constant 0 : i32
    %c0_i32_1 = arith.constant 0 : i32
    return %c0_i32, %c0_i32_0 : i32, i32
  }
  func.func @transform_3(%arg0: i32) -> (i32, i32) {
    %c0_i32 = arith.constant 0 : i32
    %c0_i32_0 = arith.constant 0 : i32
    %c0_i32_1 = arith.constant 0 : i32
    return %c0_i32, %c0_i32_0 : i32, i32
  }
  func.func @transform_4(%arg0: i32) -> (i32, i32) {
    %c0_i32 = arith.constant 0 : i32
    %c0_i32_0 = arith.constant 0 : i32
    %c0_i32_1 = arith.constant 0 : i32
    return %c0_i32, %c0_i32_0 : i32, i32
  }
  func.func @transform_5(%arg0: i32) -> (i32, i32) {
    %c0_i32 = arith.constant 0 : i32
    %c0_i32_0 = arith.constant 0 : i32
    return %arg0, %c0_i32 : i32, i32
  }
}

module attributes {stable_mosaic.version = 11 : i64} {
  func.func @_head_kernel(%arg0: i32, %arg1: memref<8x128xbf16, #tpu.memory_space<vmem>>, %arg2: memref<128x128xbf16, #tpu.memory_space<vmem>>, %arg3: memref<1x128xf32, #tpu.memory_space<vmem>>, %arg4: memref<8x128xf32, #tpu.memory_space<vmem>>) attributes {dimension_semantics = [#tpu.dimension_semantics<parallel>], iteration_bounds = array<i64: 1>, scalar_prefetch = 0 : i64, scratch_operands = 0 : i64, tpu.core_type = #tpu.core_type<tc>, window_params = [{transform_indices = @transform_0, window_bounds = array<i64: 8, 128>}, {pipeline_mode = #tpu.pipeline_mode<synchronous>, transform_indices = @transform_1, window_bounds = array<i64: 128, 128>}, {pipeline_mode = #tpu.pipeline_mode<synchronous>, transform_indices = @transform_2, window_bounds = array<i64: 1, 128>}, {transform_indices = @transform_3, window_bounds = array<i64: 8, 128>}]} {
    %c0 = arith.constant 0 : index
    %c0_0 = arith.constant 0 : index
    %0 = vector.load %arg1[%c0, %c0_0] : memref<8x128xbf16, #tpu.memory_space<vmem>>, vector<8x128xbf16>
    %c0_1 = arith.constant 0 : index
    %c0_2 = arith.constant 0 : index
    %1 = vector.load %arg2[%c0_1, %c0_2] : memref<128x128xbf16, #tpu.memory_space<vmem>>, vector<128x128xbf16>
    %cst = arith.constant dense<0.000000e+00> : vector<8x128xf32>
    %2 = tpu.matmul %0, %1, %cst {dimension_numbers = #tpu.dot_dimension_numbers<[1], [0], [0], [1], [0, 0, 1, 1], [], []>} : vector<8x128xbf16>, vector<128x128xbf16>, vector<8x128xf32> -> vector<8x128xf32>
    %c0_3 = arith.constant 0 : index
    %c0_4 = arith.constant 0 : index
    %3 = vector.load %arg3[%c0_3, %c0_4] : memref<1x128xf32, #tpu.memory_space<vmem>>, vector<1x128xf32>
    %4 = vector.broadcast %3 : vector<1x128xf32> to vector<8x128xf32>
    %5 = arith.addf %2, %4 : vector<8x128xf32>
    %6 = tpu.iota {dimensions = array<i32: 1>} : vector<8x128xi32>
    %c0_i32 = arith.constant 0 : i32
    %7 = vector.broadcast %c0_i32 : i32 to vector<8x128xi32>
    %8 = arith.cmpi eq, %6, %7 : vector<8x128xi32>
    %c1_i32 = arith.constant 1 : i32
    %9 = vector.broadcast %c1_i32 : i32 to vector<8x128xi32>
    %10 = arith.cmpi sge, %6, %9 : vector<8x128xi32>
    %c6_i32 = arith.constant 6 : i32
    %11 = vector.broadcast %c6_i32 : i32 to vector<8x128xi32>
    %12 = arith.cmpi slt, %6, %11 : vector<8x128xi32>
    %13 = arith.andi %10, %12 : vector<8x128xi1>
    %cst_5 = arith.constant 0.000000e+00 : f32
    %14 = vector.broadcast %cst_5 : f32 to vector<8x128xf32>
    %15 = arith.subf %14, %5 : vector<8x128xf32>
    %16 = math.exp %15 : vector<8x128xf32>
    %cst_6 = arith.constant 1.000000e+00 : f32
    %17 = vector.broadcast %cst_6 : f32 to vector<8x128xf32>
    %18 = arith.addf %17, %16 : vector<8x128xf32>
    %cst_7 = arith.constant 1.000000e+00 : f32
    %19 = vector.broadcast %cst_7 : f32 to vector<8x128xf32>
    %20 = arith.divf %19, %18 : vector<8x128xf32>
    %cst_8 = arith.constant 0xFF800000 : f32
    %21 = vector.broadcast %cst_8 : f32 to vector<8x128xf32>
    %22 = arith.select %13, %5, %21 : vector<8x128xi1>, vector<8x128xf32>
    %cst_9 = arith.constant dense<0xFF800000> : vector<8xf32>
    %23 = vector.multi_reduction <maximumf>, %22, %cst_9 [1] : vector<8x128xf32> to vector<8xf32>
    %24 = vector.shape_cast %23 : vector<8xf32> to vector<8x1xf32>
    %25 = vector.broadcast %24 : vector<8x1xf32> to vector<8x128xf32>
    %26 = arith.subf %5, %25 : vector<8x128xf32>
    %27 = math.exp %26 : vector<8x128xf32>
    %cst_10 = arith.constant 0.000000e+00 : f32
    %28 = vector.broadcast %cst_10 : f32 to vector<8x128xf32>
    %29 = arith.select %13, %27, %28 : vector<8x128xi1>, vector<8x128xf32>
    %cst_11 = arith.constant dense<0.000000e+00> : vector<8xf32>
    %30 = vector.multi_reduction <add>, %29, %cst_11 [1] : vector<8x128xf32> to vector<8xf32>
    %31 = vector.shape_cast %30 : vector<8xf32> to vector<8x1xf32>
    %32 = vector.broadcast %31 : vector<8x1xf32> to vector<8x128xf32>
    %33 = arith.divf %29, %32 : vector<8x128xf32>
    %cst_12 = arith.constant 0.000000e+00 : f32
    %34 = vector.broadcast %cst_12 : f32 to vector<8x128xf32>
    %35 = arith.select %13, %33, %34 : vector<8x128xi1>, vector<8x128xf32>
    %36 = arith.select %8, %20, %35 : vector<8x128xi1>, vector<8x128xf32>
    %c0_13 = arith.constant 0 : index
    %c0_14 = arith.constant 0 : index
    %37 = vector.load %arg4[%c0_13, %c0_14] : memref<8x128xf32, #tpu.memory_space<vmem>>, vector<8x128xf32>
    tpu.vector_store %arg4[%c0_13, %c0_14], %36 {strides = array<i32>} : memref<8x128xf32, #tpu.memory_space<vmem>>, vector<8x128xf32>,
    return
  }
  func.func @transform_0(%arg0: i32) -> (i32, i32) {
    %c0_i32 = arith.constant 0 : i32
    %c0_i32_0 = arith.constant 0 : i32
    return %arg0, %c0_i32 : i32, i32
  }
  func.func @transform_1(%arg0: i32) -> (i32, i32) {
    %c0_i32 = arith.constant 0 : i32
    %c0_i32_0 = arith.constant 0 : i32
    %c0_i32_1 = arith.constant 0 : i32
    return %c0_i32, %c0_i32_0 : i32, i32
  }
  func.func @transform_2(%arg0: i32) -> (i32, i32) {
    %c0_i32 = arith.constant 0 : i32
    %c0_i32_0 = arith.constant 0 : i32
    %c0_i32_1 = arith.constant 0 : i32
    return %c0_i32, %c0_i32_0 : i32, i32
  }
  func.func @transform_3(%arg0: i32) -> (i32, i32) {
    %c0_i32 = arith.constant 0 : i32
    %c0_i32_0 = arith.constant 0 : i32
    return %arg0, %c0_i32 : i32, i32
  }
}

</mosaic_0001>

<llo_original>
// kernel: discriminator_forward.5
$region0: #{discriminator_forward.5}
  #allocation0 [shape = 'u32[]', space=smem, size = 0x4, offset = 0x4, fixed_abs, tag = 'smem constant byte address 0x4 - core index']
  #allocation1 [shape = 'u32[144,128]{1,0:T(1,128)}', space=vmem, size = 0x12000, scoped, tag = 'internal scratch']
  %s0 = inlined_call_operand.vmem [shape: bf16[128,36], index: 0, kind: input, shape index: {}]
  %s1 = inlined_call_operand.vmem [shape: bf16[36,128], index: 1, kind: input, shape index: {}]
  %s2 = inlined_call_operand.vmem [shape: f32[1,128], index: 2, kind: input, shape index: {}]
  %s3 = inlined_call_operand.vmem [shape: f32[1,128], index: 3, kind: input, shape index: {}]
  %s4 = inlined_call_operand.vmem [shape: f32[1,128], index: 4, kind: input, shape index: {}]
  %s5 = inlined_call_operand.vmem [shape: bf16[128,128], index: 5, kind: output, shape index: {}]
  %s6 = sld [smem:[#allocation0]]
  $region30: #{discriminator_forward.5} parent=0
    _
  %s8 = ssub.s32 1, %s6
  %s9 = scalar_select 0, %s8, %s6
  // Predicated region
  $region2: #{discriminator_forward.5} parent=0 // pred_check
    _
  $region3: #{discriminator_forward.5} parent=0 // pred_check_branch
    %11 = sbr.rel (0) target = $region5
  $region4: #{discriminator_forward.5} parent=0 // pred_region
    _
  $region5: #{discriminator_forward.5} parent=0 // pred_fallthru
    _
  // Predicated region
  $region6: #{discriminator_forward.5} parent=0 // pred_check
    _
  $region7: #{discriminator_forward.5} parent=0 // pred_check_branch
    %13 = sbr.rel (0) target = $region9
  $region8: #{discriminator_forward.5} parent=0 // pred_region
    _
  $region9: #{discriminator_forward.5} parent=0 // pred_fallthru
    _
  // Predicated region
  $region10: #{discriminator_forward.5} parent=0 // pred_check
    _
  $region11: #{discriminator_forward.5} parent=0 // pred_check_branch
    %15 = sbr.rel (0) target = $region13
  $region12: #{discriminator_forward.5} parent=0 // pred_region
    _
  $region13: #{discriminator_forward.5} parent=0 // pred_fallthru
    _
  // Predicated region
  $region14: #{discriminator_forward.5} parent=0 // pred_check
    _
  $region15: #{discriminator_forward.5} parent=0 // pred_check_branch
    %17 = sbr.rel (0) target = $region17
  $region16: #{discriminator_forward.5} parent=0 // pred_region
    _
  $region17: #{discriminator_forward.5} parent=0 // pred_fallthru
    _
  // Predicated region
  $region18: #{discriminator_forward.5} parent=0 // pred_check
    _
  $region19: #{discriminator_forward.5} parent=0 // pred_check_branch
    %19 = sbr.rel (0) target = $region21
  $region20: #{discriminator_forward.5} parent=0 // pred_region
    _
  $region21: #{discriminator_forward.5} parent=0 // pred_fallthru
    _
  %v21 = vld [vmem:[%s0] sm:$0xf]
  %v22 = vld [vmem:[%s0 + $0x4] sm:$0xf]
  %v23 = vld [vmem:[%s0 + $0x8] sm:$0xf]
  %v24 = vld [vmem:[%s0 + $0xc] sm:$0xf]
  %v25 = vld [vmem:[%s0 + $0x10] sm:$0xf]
  %v26 = vld [vmem:[%s0 + $0x14] sm:$0xf]
  %v27 = vld [vmem:[%s0 + $0x18] sm:$0xf]
  %v28 = vld [vmem:[%s0 + $0x1c] sm:$0xf]
  %v29 = vld [vmem:[%s0 + $0x20] sm:$0xf]
  %v30 = vld [vmem:[%s0 + $0x24] sm:$0xf]
  %v31 = vld [vmem:[%s0 + $0x28] sm:$0xf]
  %v32 = vld [vmem:[%s0 + $0x2c] sm:$0xf]
  %v33 = vld [vmem:[%s0 + $0x30] sm:$0xf]
  %v34 = vld [vmem:[%s0 + $0x34] sm:$0xf]
  %v35 = vld [vmem:[%s0 + $0x38] sm:$0xf]
  %v36 = vld [vmem:[%s0 + $0x3c] sm:$0xf]
  %v37 = vld [vmem:[%s1] sm:$0xf]
  %v38 = vld [vmem:[%s1 + $0x4] sm:$0xf]
  %v39 = vld [vmem:[%s1 + $0x8] sm:$0xf]
  %v40 = vld [vmem:[%s1 + $0xc] sm:$0xf]
  %v41 = vld [vmem:[%s1 + $0x10] sm:$0x3]
  %v42 = vld [vmem:[%s2] sm:$0x1]
  %v44 = vlaneseq
  %v45 = vshrl.u32 %v44, 7
  %v46 = vsub.s32 0, %v45
  %v47 = vrot.slane %v42, %v46
  %v65 = vunpack.c.l.b16 %v21
  %v66 = vunpack.c.l.b16 %v22
  %v67 = vunpack.c.l.b16 %v23
  %v68 = vunpack.c.l.b16 %v24
  %v69 = vunpack.c.l.b16 %v25
  %v70 = vunpack.c.l.b16 %v26
  %v71 = vunpack.c.l.b16 %v27
  %v72 = vunpack.c.l.b16 %v28
  %v73 = vunpack.c.l.b16 %v29
  %v74 = vunpack.c.l.b16 %v30
  %v75 = vunpack.c.l.b16 %v31
  %v76 = vunpack.c.l.b16 %v32
  %v77 = vunpack.c.l.b16 %v33
  %v78 = vunpack.c.l.b16 %v34
  %v79 = vunpack.c.l.b16 %v35
  %v80 = vunpack.c.l.b16 %v36
  %v81 = vpack.c.b16 %v66, %v65
  %v82 = vpack.c.b16 %v68, %v67
  %v83 = vpack.c.b16 %v70, %v69
  %v84 = vpack.c.b16 %v72, %v71
  %v85 = vpack.c.b16 %v74, %v73
  %v86 = vpack.c.b16 %v76, %v75
  %v87 = vpack.c.b16 %v78, %v77
  %v88 = vpack.c.b16 %v80, %v79
  %v94 = vunpack.c.l.b16 %v37
  %v95 = vunpack.c.l.b16 %v38
  %v96 = vunpack.c.l.b16 %v39
  %v97 = vunpack.c.l.b16 %v40
  %v98 = vunpack.c.l.b16 %v41
  %v99 = vpack.c.b16 %v95, %v94
  %v100 = vpack.c.b16 %v97, %v96
  %v101 = vpack.c.b16 %v98, %v98
  %vm104 = vcmask 293888
  %v106 = vsel %vm104, %v81, 0
  %v109 = vsel %vm104, %v82, 0
  %v112 = vsel %vm104, %v83, 0
  %v115 = vsel %vm104, %v84, 0
  %v118 = vsel %vm104, %v85, 0
  %v121 = vsel %vm104, %v86, 0
  %v124 = vsel %vm104, %v87, 0
  %v127 = vsel %vm104, %v88, 0
  %vm129 = vcmask 1041408
  %v131 = vsel %vm129, %v101, 0
  %133 = vmatprep.subr.bf16.mxu0 0
  %134 = vmatpush1.bf16.msra.mxu0 %v99
  %135 = vmatprep.subr.bf16.mxu0 0
  %136 = vmatpush1.bf16.msra.mxu0 %v100
  %137 = vmatprep.subr.bf16.mxu0 0
  %138 = vmatpush1.bf16.msra.mxu0 %v131
  %139 = vmatprep.subr.bf16.mxu0 0
  %140 = vmatpush1.bf16.msra.mxu0 0
  %141 = vmatprep.subr.bf16.mxu0 0
  %142 = vmatpush1.bf16.msra.mxu0 0
  %143 = vmatprep.subr.bf16.mxu0 0
  %144 = vmatpush1.bf16.msra.mxu0 0
  %145 = vmatprep.subr.bf16.mxu0 0
  %146 = vmatpush1.bf16.msra.mxu0 0
  %147 = vmatprep.subr.bf16.mxu0 0
  %148 = vmatpush1.bf16.msra.mxu0 0
  %149 = vmatprep.subr.bf16.mxu0 0
  %150 = vmatpush1.bf16.msra.mxu0 0
  %151 = vmatprep.subr.bf16.mxu0 0
  %152 = vmatpush1.bf16.msra.mxu0 0
  %153 = vmatprep.subr.bf16.mxu0 0
  %154 = vmatpush1.bf16.msra.mxu0 0
  %155 = vmatprep.subr.bf16.mxu0 0
  %156 = vmatpush1.bf16.msra.mxu0 0
  %157 = vmatprep.subr.bf16.mxu0 0
  %158 = vmatpush1.bf16.msra.mxu0 0
  %159 = vmatprep.subr.bf16.mxu0 0
  %160 = vmatpush1.bf16.msra.mxu0 0
  %161 = vmatprep.subr.bf16.mxu0 0
  %162 = vmatpush1.bf16.msra.mxu0 0
  %163 = vmatprep.subr.bf16.mxu0 0
  %164 = vmatpush1.bf16.msra.mxu0 0
  %165 = vmatprep.mubr.bf16.mxu0 0
  %166 = vmatmul.mubr.bf16.gmra.mrb[0].mxu0 %v106
  %v167 = vpop.f32.mrb[0].mxu0
  %v168 = vadd.f32 %v47, %v167
  %v169 = vpop.f32.mrb[0].mxu0
  %v170 = vpop.f32.mrb[0].mxu0
  %v171 = vadd.f32 %v47, %v170
  %v172 = vpop.f32.mrb[0].mxu0
  %173 = vmatprep.mubr.bf16.mxu0 0
  %174 = vmatmul.mubr.bf16.gmra.mrb[0].mxu0 %v109
  %v175 = vpop.f32.mrb[0].mxu0
  %v176 = vadd.f32 %v47, %v175
  %v177 = vpop.f32.mrb[0].mxu0
  %v178 = vpop.f32.mrb[0].mxu0
  %v179 = vadd.f32 %v47, %v178
  %v180 = vpop.f32.mrb[0].mxu0
  %181 = vmatprep.mubr.bf16.mxu0 0
  %182 = vmatmul.mubr.bf16.gmra.mrb[0].mxu0 %v112
  %v183 = vpop.f32.mrb[0].mxu0
  %v184 = vadd.f32 %v47, %v183
  %v185 = vpop.f32.mrb[0].mxu0
  %v186 = vpop.f32.mrb[0].mxu0
  %v187 = vadd.f32 %v47, %v186
  %v188 = vpop.f32.mrb[0].mxu0
  %189 = vmatprep.mubr.bf16.mxu0 0
  %190 = vmatmul.mubr.bf16.gmra.mrb[0].mxu0 %v115
  %v191 = vpop.f32.mrb[0].mxu0
  %v192 = vadd.f32 %v47, %v191
  %v193 = vpop.f32.mrb[0].mxu0
  %v194 = vpop.f32.mrb[0].mxu0
  %v195 = vadd.f32 %v47, %v194
  %v196 = vpop.f32.mrb[0].mxu0
  %197 = vmatprep.mubr.bf16.mxu0 0
  %198 = vmatmul.mubr.bf16.gmra.mrb[0].mxu0 %v118
  %v199 = vpop.f32.mrb[0].mxu0
  %v200 = vadd.f32 %v47, %v199
  %v201 = vpop.f32.mrb[0].mxu0
  %v202 = vpop.f32.mrb[0].mxu0
  %v203 = vadd.f32 %v47, %v202
  %v204 = vpop.f32.mrb[0].mxu0
  %205 = vmatprep.mubr.bf16.mxu0 0
  %206 = vmatmul.mubr.bf16.gmra.mrb[0].mxu0 %v121
  %v207 = vpop.f32.mrb[0].mxu0
  %v208 = vadd.f32 %v47, %v207
  %v209 = vpop.f32.mrb[0].mxu0
  %v210 = vpop.f32.mrb[0].mxu0
  %v211 = vadd.f32 %v47, %v210
  %v212 = vpop.f32.mrb[0].mxu0
  %213 = vmatprep.mubr.bf16.mxu0 0
  %214 = vmatmul.mubr.bf16.gmra.mrb[0].mxu0 %v124
  %v215 = vpop.f32.mrb[0].mxu0
  %v216 = vadd.f32 %v47, %v215
  %v217 = vpop.f32.mrb[0].mxu0
  %v218 = vpop.f32.mrb[0].mxu0
  %v219 = vadd.f32 %v47, %v218
  %v220 = vpop.f32.mrb[0].mxu0
  %221 = vmatprep.mubr.bf16.mxu0 0
  %222 = vmatmul.mubr.bf16.gmra.mrb[0].mxu0 %v127
  %v223 = vpop.f32.mrb[0].mxu0
  %v224 = vadd.f32 %v47, %v223
  %v225 = vpop.f32.mrb[0].mxu0
  %v226 = vpop.f32.mrb[0].mxu0
  %v227 = vadd.f32 %v47, %v226
  %v228 = vpop.f32.mrb[0].mxu0
  %229 = vdwg.mxu0
  %vm230 = vcmp.ge.f32.partialorder %v168, 0.0
  %vm231 = vcmp.ge.f32.partialorder %v171, 0.0
  %vm232 = vcmp.ge.f32.partialorder %v176, 0.0
  %vm233 = vcmp.ge.f32.partialorder %v179, 0.0
  %vm234 = vcmp.ge.f32.partialorder %v184, 0.0
  %vm235 = vcmp.ge.f32.partialorder %v187, 0.0
  %vm236 = vcmp.ge.f32.partialorder %v192, 0.0
  %vm237 = vcmp.ge.f32.partialorder %v195, 0.0
  %vm238 = vcmp.ge.f32.partialorder %v200, 0.0
  %vm239 = vcmp.ge.f32.partialorder %v203, 0.0
  %vm240 = vcmp.ge.f32.partialorder %v208, 0.0
  %vm241 = vcmp.ge.f32.partialorder %v211, 0.0
  %vm242 = vcmp.ge.f32.partialorder %v216, 0.0
  %vm243 = vcmp.ge.f32.partialorder %v219, 0.0
  %vm244 = vcmp.ge.f32.partialorder %v224, 0.0
  %vm245 = vcmp.ge.f32.partialorder %v227, 0.0
  %v246 = vmul.f32 %v168, 0.2
  %v247 = vmul.f32 %v171, 0.2
  %v248 = vmul.f32 %v176, 0.2
  %v249 = vmul.f32 %v179, 0.2
  %v250 = vmul.f32 %v184, 0.2
  %v251 = vmul.f32 %v187, 0.2
  %v252 = vmul.f32 %v192, 0.2
  %v253 = vmul.f32 %v195, 0.2
  %v254 = vmul.f32 %v200, 0.2
  %v255 = vmul.f32 %v203, 0.2
  %v256 = vmul.f32 %v208, 0.2
  %v257 = vmul.f32 %v211, 0.2
  %v258 = vmul.f32 %v216, 0.2
  %v259 = vmul.f32 %v219, 0.2
  %v260 = vmul.f32 %v224, 0.2
  %v261 = vmul.f32 %v227, 0.2
  %v262 = vsel %vm230, %v168, %v246
  %v263 = vsel %vm231, %v171, %v247
  %v264 = vsel %vm232, %v176, %v248
  %v265 = vsel %vm233, %v179, %v249
  %v266 = vsel %vm234, %v184, %v250
  %v267 = vsel %vm235, %v187, %v251
  %v268 = vsel %vm236, %v192, %v252
  %v269 = vsel %vm237, %v195, %v253
  %v270 = vsel %vm238, %v200, %v254
  %v271 = vsel %vm239, %v203, %v255
  %v272 = vsel %vm240, %v208, %v256
  %v273 = vsel %vm241, %v211, %v257
  %v274 = vsel %vm242, %v216, %v258
  %v275 = vsel %vm243, %v219, %v259
  %v276 = vsel %vm244, %v224, %v260
  %v277 = vsel %vm245, %v227, %v261
  %v278 = vld [vmem:[%s3] sm:$0x1]
  %v280 = vlaneseq
  %v281 = vshrl.u32 %v280, 7
  %v282 = vsub.s32 0, %v281
  %v283 = vrot.slane %v278, %v282
  %v285 = vmul.f32 %v262, %v283
  %v286 = vmul.f32 %v263, %v283
  %v287 = vmul.f32 %v264, %v283
  %v288 = vmul.f32 %v265, %v283
  %v289 = vmul.f32 %v266, %v283
  %v290 = vmul.f32 %v267, %v283
  %v291 = vmul.f32 %v268, %v283
  %v292 = vmul.f32 %v269, %v283
  %v293 = vmul.f32 %v270, %v283
  %v294 = vmul.f32 %v271, %v283
  %v295 = vmul.f32 %v272, %v283
  %v296 = vmul.f32 %v273, %v283
  %v297 = vmul.f32 %v274, %v283
  %v298 = vmul.f32 %v275, %v283
  %v299 = vmul.f32 %v276, %v283
  %v300 = vmul.f32 %v277, %v283
  %v301 = vld [vmem:[%s4] sm:$0x1]
  %v303 = vlaneseq
  %v304 = vshrl.u32 %v303, 7
  %v305 = vsub.s32 0, %v304
  %v306 = vrot.slane %v301, %v305
  %v308 = vadd.f32 %v285, %v306
  %v309 = vadd.f32 %v286, %v306
  %v310 = vadd.f32 %v287, %v306
  %v311 = vadd.f32 %v288, %v306
  %v312 = vadd.f32 %v289, %v306
  %v313 = vadd.f32 %v290, %v306
  %v314 = vadd.f32 %v291, %v306
  %v315 = vadd.f32 %v292, %v306
  %v316 = vadd.f32 %v293, %v306
  %v317 = vadd.f32 %v294, %v306
  %v318 = vadd.f32 %v295, %v306
  %v319 = vadd.f32 %v296, %v306
  %v320 = vadd.f32 %v297, %v306
  %v321 = vadd.f32 %v298, %v306
  %v322 = vadd.f32 %v299, %v306
  %v323 = vadd.f32 %v300, %v306
  %v324 = vpack.c.bf16 %v309, %v308
  %v325 = vpack.c.bf16 %v311, %v310
  %v326 = vpack.c.bf16 %v313, %v312
  %v327 = vpack.c.bf16 %v315, %v314
  %v328 = vpack.c.bf16 %v317, %v316
  %v329 = vpack.c.bf16 %v319, %v318
  %v330 = vpack.c.bf16 %v321, %v320
  %v331 = vpack.c.bf16 %v323, %v322
  %v340 = vunpack.c.l.b16 %v324
  %v341 = vunpack.c.h.b16 %v324
  %v342 = vunpack.c.l.b16 %v325
  %v343 = vunpack.c.h.b16 %v325
  %v344 = vunpack.c.l.b16 %v326
  %v345 = vunpack.c.h.b16 %v326
  %v346 = vunpack.c.l.b16 %v327
  %v347 = vunpack.c.h.b16 %v327
  %v348 = vunpack.c.l.b16 %v328
  %v349 = vunpack.c.h.b16 %v328
  %v350 = vunpack.c.l.b16 %v329
  %v351 = vunpack.c.h.b16 %v329
  %v352 = vunpack.c.l.b16 %v330
  %v353 = vunpack.c.h.b16 %v330
  %v354 = vunpack.c.l.b16 %v331
  %v355 = vunpack.c.h.b16 %v331
  %v356 = vpack.c.b16 %v340, %v340
  %v357 = vpack.c.b16 %v341, %v341
  %v358 = vpack.c.b16 %v342, %v342
  %v359 = vpack.c.b16 %v343, %v343
  %v360 = vpack.c.b16 %v344, %v344
  %v361 = vpack.c.b16 %v345, %v345
  %v362 = vpack.c.b16 %v346, %v346
  %v363 = vpack.c.b16 %v347, %v347
  %v364 = vpack.c.b16 %v348, %v348
  %v365 = vpack.c.b16 %v349, %v349
  %v366 = vpack.c.b16 %v350, %v350
  %v367 = vpack.c.b16 %v351, %v351
  %v368 = vpack.c.b16 %v352, %v352
  %v369 = vpack.c.b16 %v353, %v353
  %v370 = vpack.c.b16 %v354, %v354
  %v371 = vpack.c.b16 %v355, %v355
  %388 = vst [vmem:[%s5] sm:$0xf] %v356
  %389 = vst [vmem:[%s5 + $0x4] sm:$0xf] %v357
  %390 = vst [vmem:[%s5 + $0x8] sm:$0xf] %v358
  %391 = vst [vmem:[%s5 + $0xc] sm:$0xf] %v359
  %392 = vst [vmem:[%s5 + $0x10] sm:$0xf] %v360
  %393 = vst [vmem:[%s5 + $0x14] sm:$0xf] %v361
  %394 = vst [vmem:[%s5 + $0x18] sm:$0xf] %v362
  %395 = vst [vmem:[%s5 + $0x1c] sm:$0xf] %v363
  %396 = vst [vmem:[%s5 + $0x20] sm:$0xf] %v364
  %397 = vst [vmem:[%s5 + $0x24] sm:$0xf] %v365
  %398 = vst [vmem:[%s5 + $0x28] sm:$0xf] %v366
  %399 = vst [vmem:[%s5 + $0x2c] sm:$0xf] %v367
  %400 = vst [vmem:[%s5 + $0x30] sm:$0xf] %v368
  %401 = vst [vmem:[%s5 + $0x34] sm:$0xf] %v369
  %402 = vst [vmem:[%s5 + $0x38] sm:$0xf] %v370
  %403 = vst [vmem:[%s5 + $0x3c] sm:$0xf] %v371
  // Predicated region
  $region22: #{discriminator_forward.5} parent=0 // pred_check
    _
  $region23: #{discriminator_forward.5} parent=0 // pred_check_branch
    %405 = sbr.rel (0) target = $region25
  $region24: #{discriminator_forward.5} parent=0 // pred_region
    _
  $region25: #{discriminator_forward.5} parent=0 // pred_fallthru
    _
  // Predicated region
  $region26: #{discriminator_forward.5} parent=0 // pred_check
    _
  $region27: #{discriminator_forward.5} parent=0 // pred_check_branch
    %407 = sbr.rel (0) target = $region29
  $region28: #{discriminator_forward.5} parent=0 // pred_region
    _
  $region29: #{discriminator_forward.5} parent=0 // pred_fallthru
    _

// kernel: discriminator_forward.6
$region0: #{discriminator_forward.6}
  #allocation0 [shape = 'u32[]', space=smem, size = 0x4, offset = 0x4, fixed_abs, tag = 'smem constant byte address 0x4 - core index']
  #allocation1 [shape = 'u32[144,128]{1,0:T(1,128)}', space=vmem, size = 0x12000, scoped, tag = 'internal scratch']
  %s0 = inlined_call_operand.vmem [shape: bf16[32,144], index: 0, kind: input, shape index: {}]
  %s1 = inlined_call_operand.vmem [shape: bf16[144,128], index: 1, kind: input, shape index: {}]
  %s2 = inlined_call_operand.vmem [shape: f32[1,128], index: 2, kind: input, shape index: {}]
  %s3 = inlined_call_operand.vmem [shape: f32[1,128], index: 3, kind: input, shape index: {}]
  %s4 = inlined_call_operand.vmem [shape: f32[1,128], index: 4, kind: input, shape index: {}]
  %s5 = inlined_call_operand.vmem [shape: bf16[32,128], index: 5, kind: output, shape index: {}]
  %s6 = sld [smem:[#allocation0]]
  $region30: #{discriminator_forward.6} parent=0
    _
  %s8 = ssub.s32 1, %s6
  %s9 = scalar_select 0, %s8, %s6
  // Predicated region
  $region2: #{discriminator_forward.6} parent=0 // pred_check
    _
  $region3: #{discriminator_forward.6} parent=0 // pred_check_branch
    %11 = sbr.rel (0) target = $region5
  $region4: #{discriminator_forward.6} parent=0 // pred_region
    _
  $region5: #{discriminator_forward.6} parent=0 // pred_fallthru
    _
  // Predicated region
  $region6: #{discriminator_forward.6} parent=0 // pred_check
    _
  $region7: #{discriminator_forward.6} parent=0 // pred_check_branch
    %13 = sbr.rel (0) target = $region9
  $region8: #{discriminator_forward.6} parent=0 // pred_region
    _
  $region9: #{discriminator_forward.6} parent=0 // pred_fallthru
    _
  // Predicated region
  $region10: #{discriminator_forward.6} parent=0 // pred_check
    _
  $region11: #{discriminator_forward.6} parent=0 // pred_check_branch
    %15 = sbr.rel (0) target = $region13
  $region12: #{discriminator_forward.6} parent=0 // pred_region
    _
  $region13: #{discriminator_forward.6} parent=0 // pred_fallthru
    _
  // Predicated region
  $region14: #{discriminator_forward.6} parent=0 // pred_check
    _
  $region15: #{discriminator_forward.6} parent=0 // pred_check_branch
    %17 = sbr.rel (0) target = $region17
  $region16: #{discriminator_forward.6} parent=0 // pred_region
    _
  $region17: #{discriminator_forward.6} parent=0 // pred_fallthru
    _
  // Predicated region
  $region18: #{discriminator_forward.6} parent=0 // pred_check
    _
  $region19: #{discriminator_forward.6} parent=0 // pred_check_branch
    %19 = sbr.rel (0) target = $region21
  $region20: #{discriminator_forward.6} parent=0 // pred_region
    _
  $region21: #{discriminator_forward.6} parent=0 // pred_fallthru
    _
  %v21 = vld [vmem:[%s0] sm:$0xff]
  %v22 = vld [vmem:[%s0 + $0x8] sm:$0xff]
  %v23 = vld [vmem:[%s0 + $0x10] sm:$0xff]
  %v24 = vld [vmem:[%s0 + $0x18] sm:$0xff]
  %v25 = vld [vmem:[%s1] sm:$0xf]
  %v26 = vld [vmem:[%s1 + $0x4] sm:$0xf]
  %v27 = vld [vmem:[%s1 + $0x8] sm:$0xf]
  %v28 = vld [vmem:[%s1 + $0xc] sm:$0xf]
  %v29 = vld [vmem:[%s1 + $0x10] sm:$0xf]
  %v30 = vld [vmem:[%s1 + $0x14] sm:$0xf]
  %v31 = vld [vmem:[%s1 + $0x18] sm:$0xf]
  %v32 = vld [vmem:[%s1 + $0x1c] sm:$0xf]
  %v33 = vld [vmem:[%s1 + $0x20] sm:$0xf]
  %v34 = vld [vmem:[%s1 + $0x24] sm:$0xf]
  %v35 = vld [vmem:[%s1 + $0x28] sm:$0xf]
  %v36 = vld [vmem:[%s1 + $0x2c] sm:$0xf]
  %v37 = vld [vmem:[%s1 + $0x30] sm:$0xf]
  %v38 = vld [vmem:[%s1 + $0x34] sm:$0xf]
  %v39 = vld [vmem:[%s1 + $0x38] sm:$0xf]
  %v40 = vld [vmem:[%s1 + $0x3c] sm:$0xf]
  %v41 = vld [vmem:[%s1 + $0x40] sm:$0xf]
  %v42 = vld [vmem:[%s1 + $0x44] sm:$0xf]
  %v43 = vld [vmem:[%s2] sm:$0x1]
  %v45 = vlaneseq
  %v46 = vshrl.u32 %v45, 7
  %v47 = vsub.s32 0, %v46
  %v48 = vrot.slane %v43, %v47
  %v54 = vunpack.c.l.b16 %v21
  %v55 = vunpack.c.h.b16 %v21
  %v56 = vunpack.c.l.b16 %v22
  %v57 = vunpack.c.h.b16 %v22
  %v58 = vunpack.c.l.b16 %v23
  %v59 = vunpack.c.h.b16 %v23
  %v60 = vunpack.c.l.b16 %v24
  %v61 = vunpack.c.h.b16 %v24
  %v62 = vpack.c.b16 %v56, %v54
  %v63 = vpack.c.b16 %v57, %v55
  %v64 = vpack.c.b16 %v60, %v58
  %v65 = vpack.c.b16 %v61, %v59
  %v86 = vunpack.c.l.b16 %v25
  %v87 = vunpack.c.l.b16 %v26
  %v88 = vunpack.c.l.b16 %v27
  %v89 = vunpack.c.l.b16 %v28
  %v90 = vunpack.c.l.b16 %v29
  %v91 = vunpack.c.l.b16 %v30
  %v92 = vunpack.c.l.b16 %v31
  %v93 = vunpack.c.l.b16 %v32
  %v94 = vunpack.c.l.b16 %v33
  %v95 = vunpack.c.l.b16 %v34
  %v96 = vunpack.c.l.b16 %v35
  %v97 = vunpack.c.l.b16 %v36
  %v98 = vunpack.c.l.b16 %v37
  %v99 = vunpack.c.l.b16 %v38
  %v100 = vunpack.c.l.b16 %v39
  %v101 = vunpack.c.l.b16 %v40
  %v102 = vunpack.c.l.b16 %v41
  %v103 = vunpack.c.l.b16 %v42
  %v104 = vpack.c.b16 %v87, %v86
  %v105 = vpack.c.b16 %v89, %v88
  %v106 = vpack.c.b16 %v91, %v90
  %v107 = vpack.c.b16 %v93, %v92
  %v108 = vpack.c.b16 %v95, %v94
  %v109 = vpack.c.b16 %v97, %v96
  %v110 = vpack.c.b16 %v99, %v98
  %v111 = vpack.c.b16 %v101, %v100
  %v112 = vpack.c.b16 %v103, %v102
  %vm122 = vcmask 130048
  %v124 = vsel %vm122, %v63, 0
  %v127 = vsel %vm122, %v65, 0
  %129 = vmatprep.subr.bf16.mxu0 0
  %130 = vmatpush1.bf16.msra.mxu0 %v104
  %131 = vmatprep.subr.bf16.mxu0 0
  %132 = vmatpush1.bf16.msra.mxu0 %v105
  %133 = vmatprep.subr.bf16.mxu0 0
  %134 = vmatpush1.bf16.msra.mxu0 %v106
  %135 = vmatprep.subr.bf16.mxu0 0
  %136 = vmatpush1.bf16.msra.mxu0 %v107
  %137 = vmatprep.subr.bf16.mxu0 0
  %138 = vmatpush1.bf16.msra.mxu0 %v108
  %139 = vmatprep.subr.bf16.mxu0 0
  %140 = vmatpush1.bf16.msra.mxu0 %v109
  %141 = vmatprep.subr.bf16.mxu0 0
  %142 = vmatpush1.bf16.msra.mxu0 %v110
  %143 = vmatprep.subr.bf16.mxu0 0
  %144 = vmatpush1.bf16.msra.mxu0 %v111
  %145 = vmatprep.subr.bf16.mxu0 0
  %146 = vmatpush1.bf16.msra.mxu0 %v112
  %147 = vmatprep.subr.bf16.mxu0 0
  %148 = vmatpush1.bf16.msra.mxu0 0
  %149 = vmatprep.subr.bf16.mxu0 0
  %150 = vmatpush1.bf16.msra.mxu0 0
  %151 = vmatprep.subr.bf16.mxu0 0
  %152 = vmatpush1.bf16.msra.mxu0 0
  %153 = vmatprep.subr.bf16.mxu0 0
  %154 = vmatpush1.bf16.msra.mxu0 0
  %155 = vmatprep.subr.bf16.mxu0 0
  %156 = vmatpush1.bf16.msra.mxu0 0
  %157 = vmatprep.subr.bf16.mxu0 0
  %158 = vmatpush1.bf16.msra.mxu0 0
  %159 = vmatprep.subr.bf16.mxu0 0
  %160 = vmatpush1.bf16.msra.mxu0 0
  %161 = vmatprep.mubr.bf16.mxu0 %v124
  %162 = vmatmul.mubr.bf16.gmra.mrb[0].mxu0 %v62
  %v163 = vpop.f32.mrb[0].mxu0
  %v164 = vadd.f32 %v48, %v163
  %v165 = vpop.f32.mrb[0].mxu0
  %v166 = vpop.f32.mrb[0].mxu0
  %v167 = vadd.f32 %v48, %v166
  %v168 = vpop.f32.mrb[0].mxu0
  %169 = vmatprep.mubr.bf16.mxu0 %v127
  %170 = vmatmul.mubr.bf16.gmra.mrb[0].mxu0 %v64
  %v171 = vpop.f32.mrb[0].mxu0
  %v172 = vadd.f32 %v48, %v171
  %v173 = vpop.f32.mrb[0].mxu0
  %v174 = vpop.f32.mrb[0].mxu0
  %v175 = vadd.f32 %v48, %v174
  %v176 = vpop.f32.mrb[0].mxu0
  %177 = vdwg.mxu0
  %vm178 = vcmp.ge.f32.partialorder %v164, 0.0
  %vm179 = vcmp.ge.f32.partialorder %v167, 0.0
  %vm180 = vcmp.ge.f32.partialorder %v172, 0.0
  %vm181 = vcmp.ge.f32.partialorder %v175, 0.0
  %v182 = vmul.f32 %v164, 0.2
  %v183 = vmul.f32 %v167, 0.2
  %v184 = vmul.f32 %v172, 0.2
  %v185 = vmul.f32 %v175, 0.2
  %v186 = vsel %vm178, %v164, %v182
  %v187 = vsel %vm179, %v167, %v183
  %v188 = vsel %vm180, %v172, %v184
  %v189 = vsel %vm181, %v175, %v185
  %v190 = vld [vmem:[%s3] sm:$0x1]
  %v192 = vlaneseq
  %v193 = vshrl.u32 %v192, 7
  %v194 = vsub.s32 0, %v193
  %v195 = vrot.slane %v190, %v194
  %v197 = vmul.f32 %v186, %v195
  %v198 = vmul.f32 %v187, %v195
  %v199 = vmul.f32 %v188, %v195
  %v200 = vmul.f32 %v189, %v195
  %v201 = vld [vmem:[%s4] sm:$0x1]
  %v203 = vlaneseq
  %v204 = vshrl.u32 %v203, 7
  %v205 = vsub.s32 0, %v204
  %v206 = vrot.slane %v201, %v205
  %v208 = vadd.f32 %v197, %v206
  %v209 = vadd.f32 %v198, %v206
  %v210 = vadd.f32 %v199, %v206
  %v211 = vadd.f32 %v200, %v206
  %v212 = vpack.c.bf16 %v209, %v208
  %v213 = vpack.c.bf16 %v211, %v210
  %v216 = vunpack.c.l.b16 %v212
  %v217 = vunpack.c.h.b16 %v212
  %v218 = vunpack.c.l.b16 %v213
  %v219 = vunpack.c.h.b16 %v213
  %v220 = vpack.c.b16 %v216, %v216
  %v221 = vpack.c.b16 %v217, %v217
  %v222 = vpack.c.b16 %v218, %v218
  %v223 = vpack.c.b16 %v219, %v219
  %228 = vst [vmem:[%s5] sm:$0xf] %v220
  %229 = vst [vmem:[%s5 + $0x4] sm:$0xf] %v221
  %230 = vst [vmem:[%s5 + $0x8] sm:$0xf] %v222
  %231 = vst [vmem:[%s5 + $0xc] sm:$0xf] %v223
  // Predicated region
  $region22: #{discriminator_forward.6} parent=0 // pred_check
    _
  $region23: #{discriminator_forward.6} parent=0 // pred_check_branch
    %233 = sbr.rel (0) target = $region25
  $region24: #{discriminator_forward.6} parent=0 // pred_region
    _
  $region25: #{discriminator_forward.6} parent=0 // pred_fallthru
    _
  // Predicated region
  $region26: #{discriminator_forward.6} parent=0 // pred_check
    _
  $region27: #{discriminator_forward.6} parent=0 // pred_check_branch
    %235 = sbr.rel (0) target = $region29
  $region28: #{discriminator_forward.6} parent=0 // pred_region
    _
  $region29: #{discriminator_forward.6} parent=0 // pred_fallthru
    _

// kernel: discriminator_forward.7
$region0: #{discriminator_forward.7}
  #allocation0 [shape = 'u32[]', space=smem, size = 0x4, offset = 0x4, fixed_abs, tag = 'smem constant byte address 0x4 - core index']
  #allocation1 [shape = 'u32[144,128]{1,0:T(1,128)}', space=vmem, size = 0x12000, scoped, tag = 'internal scratch']
  %s0 = inlined_call_operand.vmem [shape: bf16[8,288], index: 0, kind: input, shape index: {}]
  %s1 = inlined_call_operand.vmem [shape: bf16[288,128], index: 1, kind: input, shape index: {}]
  %s2 = inlined_call_operand.vmem [shape: f32[1,128], index: 2, kind: input, shape index: {}]
  %s3 = inlined_call_operand.vmem [shape: f32[1,128], index: 3, kind: input, shape index: {}]
  %s4 = inlined_call_operand.vmem [shape: f32[1,128], index: 4, kind: input, shape index: {}]
  %s5 = inlined_call_operand.vmem [shape: bf16[8,128], index: 5, kind: output, shape index: {}]
  %s6 = sld [smem:[#allocation0]]
  $region30: #{discriminator_forward.7} parent=0
    _
  %s8 = ssub.s32 1, %s6
  %s9 = scalar_select 0, %s8, %s6
  // Predicated region
  $region2: #{discriminator_forward.7} parent=0 // pred_check
    _
  $region3: #{discriminator_forward.7} parent=0 // pred_check_branch
    %11 = sbr.rel (0) target = $region5
  $region4: #{discriminator_forward.7} parent=0 // pred_region
    _
  $region5: #{discriminator_forward.7} parent=0 // pred_fallthru
    _
  // Predicated region
  $region6: #{discriminator_forward.7} parent=0 // pred_check
    _
  $region7: #{discriminator_forward.7} parent=0 // pred_check_branch
    %13 = sbr.rel (0) target = $region9
  $region8: #{discriminator_forward.7} parent=0 // pred_region
    _
  $region9: #{discriminator_forward.7} parent=0 // pred_fallthru
    _
  // Predicated region
  $region10: #{discriminator_forward.7} parent=0 // pred_check
    _
  $region11: #{discriminator_forward.7} parent=0 // pred_check_branch
    %15 = sbr.rel (0) target = $region13
  $region12: #{discriminator_forward.7} parent=0 // pred_region
    _
  $region13: #{discriminator_forward.7} parent=0 // pred_fallthru
    _
  // Predicated region
  $region14: #{discriminator_forward.7} parent=0 // pred_check
    _
  $region15: #{discriminator_forward.7} parent=0 // pred_check_branch
    %17 = sbr.rel (0) target = $region17
  $region16: #{discriminator_forward.7} parent=0 // pred_region
    _
  $region17: #{discriminator_forward.7} parent=0 // pred_fallthru
    _
  // Predicated region
  $region18: #{discriminator_forward.7} parent=0 // pred_check
    _
  $region19: #{discriminator_forward.7} parent=0 // pred_check_branch
    %19 = sbr.rel (0) target = $region21
  $region20: #{discriminator_forward.7} parent=0 // pred_region
    _
  $region21: #{discriminator_forward.7} parent=0 // pred_fallthru
    _
  %v21 = vld [vmem:[%s0] sm:$0xff]
  %v22 = vld [vmem:[%s0 + $0x8] sm:$0xf]
  %v23 = vld [vmem:[%s1] sm:$0xf]
  %v24 = vld [vmem:[%s1 + $0x4] sm:$0xf]
  %v25 = vld [vmem:[%s1 + $0x8] sm:$0xf]
  %v26 = vld [vmem:[%s1 + $0xc] sm:$0xf]
  %v27 = vld [vmem:[%s1 + $0x10] sm:$0xf]
  %v28 = vld [vmem:[%s1 + $0x14] sm:$0xf]
  %v29 = vld [vmem:[%s1 + $0x18] sm:$0xf]
  %v30 = vld [vmem:[%s1 + $0x1c] sm:$0xf]
  %v31 = vld [vmem:[%s1 + $0x20] sm:$0xf]
  %v32 = vld [vmem:[%s1 + $0x24] sm:$0xf]
  %v33 = vld [vmem:[%s1 + $0x28] sm:$0xf]
  %v34 = vld [vmem:[%s1 + $0x2c] sm:$0xf]
  %v35 = vld [vmem:[%s1 + $0x30] sm:$0xf]
  %v36 = vld [vmem:[%s1 + $0x34] sm:$0xf]
  %v37 = vld [vmem:[%s1 + $0x38] sm:$0xf]
  %v38 = vld [vmem:[%s1 + $0x3c] sm:$0xf]
  %v39 = vld [vmem:[%s1 + $0x40] sm:$0xf]
  %v40 = vld [vmem:[%s1 + $0x44] sm:$0xf]
  %v41 = vld [vmem:[%s1 + $0x48] sm:$0xf]
  %v42 = vld [vmem:[%s1 + $0x4c] sm:$0xf]
  %v43 = vld [vmem:[%s1 + $0x50] sm:$0xf]
  %v44 = vld [vmem:[%s1 + $0x54] sm:$0xf]
  %v45 = vld [vmem:[%s1 + $0x58] sm:$0xf]
  %v46 = vld [vmem:[%s1 + $0x5c] sm:$0xf]
  %v47 = vld [vmem:[%s1 + $0x60] sm:$0xf]
  %v48 = vld [vmem:[%s1 + $0x64] sm:$0xf]
  %v49 = vld [vmem:[%s1 + $0x68] sm:$0xf]
  %v50 = vld [vmem:[%s1 + $0x6c] sm:$0xf]
  %v51 = vld [vmem:[%s1 + $0x70] sm:$0xf]
  %v52 = vld [vmem:[%s1 + $0x74] sm:$0xf]
  %v53 = vld [vmem:[%s1 + $0x78] sm:$0xf]
  %v54 = vld [vmem:[%s1 + $0x7c] sm:$0xf]
  %v55 = vld [vmem:[%s1 + $0x80] sm:$0xf]
  %v56 = vld [vmem:[%s1 + $0x84] sm:$0xf]
  %v57 = vld [vmem:[%s1 + $0x88] sm:$0xf]
  %v58 = vld [vmem:[%s1 + $0x8c] sm:$0xf]
  %v59 = vld [vmem:[%s2] sm:$0x1]
  %v61 = vlaneseq
  %v62 = vshrl.u32 %v61, 7
  %v63 = vsub.s32 0, %v62
  %v64 = vrot.slane %v59, %v63
  %v68 = vunpack.c.l.b16 %v21
  %v69 = vunpack.c.h.b16 %v21
  %v70 = vunpack.c.l.b16 %v22
  %v71 = vpack.c.b16 %v68, %v68
  %v72 = vpack.c.b16 %v69, %v69
  %v73 = vpack.c.b16 %v70, %v70
  %v112 = vunpack.c.l.b16 %v23
  %v113 = vunpack.c.l.b16 %v24
  %v114 = vunpack.c.l.b16 %v25
  %v115 = vunpack.c.l.b16 %v26
  %v116 = vunpack.c.l.b16 %v27
  %v117 = vunpack.c.l.b16 %v28
  %v118 = vunpack.c.l.b16 %v29
  %v119 = vunpack.c.l.b16 %v30
  %v120 = vunpack.c.l.b16 %v31
  %v121 = vunpack.c.l.b16 %v32
  %v122 = vunpack.c.l.b16 %v33
  %v123 = vunpack.c.l.b16 %v34
  %v124 = vunpack.c.l.b16 %v35
  %v125 = vunpack.c.l.b16 %v36
  %v126 = vunpack.c.l.b16 %v37
  %v127 = vunpack.c.l.b16 %v38
  %v128 = vunpack.c.l.b16 %v39
  %v129 = vunpack.c.l.b16 %v40
  %v130 = vunpack.c.l.b16 %v41
  %v131 = vunpack.c.l.b16 %v42
  %v132 = vunpack.c.l.b16 %v43
  %v133 = vunpack.c.l.b16 %v44
  %v134 = vunpack.c.l.b16 %v45
  %v135 = vunpack.c.l.b16 %v46
  %v136 = vunpack.c.l.b16 %v47
  %v137 = vunpack.c.l.b16 %v48
  %v138 = vunpack.c.l.b16 %v49
  %v139 = vunpack.c.l.b16 %v50
  %v140 = vunpack.c.l.b16 %v51
  %v141 = vunpack.c.l.b16 %v52
  %v142 = vunpack.c.l.b16 %v53
  %v143 = vunpack.c.l.b16 %v54
  %v144 = vunpack.c.l.b16 %v55
  %v145 = vunpack.c.l.b16 %v56
  %v146 = vunpack.c.l.b16 %v57
  %v147 = vunpack.c.l.b16 %v58
  %v148 = vpack.c.b16 %v113, %v112
  %v149 = vpack.c.b16 %v115, %v114
  %v150 = vpack.c.b16 %v117, %v116
  %v151 = vpack.c.b16 %v119, %v118
  %v152 = vpack.c.b16 %v121, %v120
  %v153 = vpack.c.b16 %v123, %v122
  %v154 = vpack.c.b16 %v125, %v124
  %v155 = vpack.c.b16 %v127, %v126
  %v156 = vpack.c.b16 %v129, %v128
  %v157 = vpack.c.b16 %v131, %v130
  %v158 = vpack.c.b16 %v133, %v132
  %v159 = vpack.c.b16 %v135, %v134
  %v160 = vpack.c.b16 %v137, %v136
  %v161 = vpack.c.b16 %v139, %v138
  %v162 = vpack.c.b16 %v141, %v140
  %v163 = vpack.c.b16 %v143, %v142
  %v164 = vpack.c.b16 %v145, %v144
  %v165 = vpack.c.b16 %v147, %v146
  %vm184 = vcmask 261120
  %v186 = vsel %vm184, %v73, 0
  %188 = vmatprep.subr.bf16.mxu0 0
  %189 = vmatpush1.bf16.msra.mxu0 %v148
  %190 = vmatprep.subr.bf16.mxu0 0
  %191 = vmatpush1.bf16.msra.mxu0 %v149
  %192 = vmatprep.subr.bf16.mxu0 0
  %193 = vmatpush1.bf16.msra.mxu0 %v150
  %194 = vmatprep.subr.bf16.mxu0 0
  %195 = vmatpush1.bf16.msra.mxu0 %v151
  %196 = vmatprep.subr.bf16.mxu0 0
  %197 = vmatpush1.bf16.msra.mxu0 %v152
  %198 = vmatprep.subr.bf16.mxu0 0
  %199 = vmatpush1.bf16.msra.mxu0 %v153
  %200 = vmatprep.subr.bf16.mxu0 0
  %201 = vmatpush1.bf16.msra.mxu0 %v154
  %202 = vmatprep.subr.bf16.mxu0 0
  %203 = vmatpush1.bf16.msra.mxu0 %v155
  %204 = vmatprep.subr.bf16.mxu0 0
  %205 = vmatpush1.bf16.msra.mxu0 %v156
  %206 = vmatprep.subr.bf16.mxu0 0
  %207 = vmatpush1.bf16.msra.mxu0 %v157
  %208 = vmatprep.subr.bf16.mxu0 0
  %209 = vmatpush1.bf16.msra.mxu0 %v158
  %210 = vmatprep.subr.bf16.mxu0 0
  %211 = vmatpush1.bf16.msra.mxu0 %v159
  %212 = vmatprep.subr.bf16.mxu0 0
  %213 = vmatpush1.bf16.msra.mxu0 %v160
  %214 = vmatprep.subr.bf16.mxu0 0
  %215 = vmatpush1.bf16.msra.mxu0 %v161
  %216 = vmatprep.subr.bf16.mxu0 0
  %217 = vmatpush1.bf16.msra.mxu0 %v162
  %218 = vmatprep.subr.bf16.mxu0 0
  %219 = vmatpush1.bf16.msra.mxu0 %v163
  %220 = vmatprep.mubr.bf16.mxu0 %v72
  %221 = vmatmul.mubr.bf16.gmra.mrb[0].mxu0 %v71
  %v222 = vpop.f32.mrb[0].mxu0
  %v223 = vadd.f32 %v64, %v222
  %v224 = vpop.f32.mrb[0].mxu0
  %v225 = vpop.f32.mrb[0].mxu0
  %v226 = vpop.f32.mrb[0].mxu0
  %227 = vdwg.mxu0
  %228 = vmatprep.subr.bf16.mxu0 0
  %229 = vmatpush1.bf16.msra.mxu0 %v164
  %230 = vmatprep.subr.bf16.mxu0 0
  %231 = vmatpush1.bf16.msra.mxu0 %v165
  %232 = vmatprep.subr.bf16.mxu0 0
  %233 = vmatpush1.bf16.msra.mxu0 0
  %234 = vmatprep.subr.bf16.mxu0 0
  %235 = vmatpush1.bf16.msra.mxu0 0
  %236 = vmatprep.subr.bf16.mxu0 0
  %237 = vmatpush1.bf16.msra.mxu0 0
  %238 = vmatprep.subr.bf16.mxu0 0
  %239 = vmatpush1.bf16.msra.mxu0 0
  %240 = vmatprep.subr.bf16.mxu0 0
  %241 = vmatpush1.bf16.msra.mxu0 0
  %242 = vmatprep.subr.bf16.mxu0 0
  %243 = vmatpush1.bf16.msra.mxu0 0
  %244 = vmatprep.subr.bf16.mxu0 0
  %245 = vmatpush1.bf16.msra.mxu0 0
  %246 = vmatprep.subr.bf16.mxu0 0
  %247 = vmatpush1.bf16.msra.mxu0 0
  %248 = vmatprep.subr.bf16.mxu0 0
  %249 = vmatpush1.bf16.msra.mxu0 0
  %250 = vmatprep.subr.bf16.mxu0 0
  %251 = vmatpush1.bf16.msra.mxu0 0
  %252 = vmatprep.subr.bf16.mxu0 0
  %253 = vmatpush1.bf16.msra.mxu0 0
  %254 = vmatprep.subr.bf16.mxu0 0
  %255 = vmatpush1.bf16.msra.mxu0 0
  %256 = vmatprep.subr.bf16.mxu0 0
  %257 = vmatpush1.bf16.msra.mxu0 0
  %258 = vmatprep.subr.bf16.mxu0 0
  %259 = vmatpush1.bf16.msra.mxu0 0
  %260 = vmatprep.mubr.bf16.mxu0 0
  %261 = vmatmul.mubr.bf16.gmra.mrb[0].mxu0 %v186
  %v262 = vpop.f32.mrb[0].mxu0
  %v263 = vadd.f32 %v223, %v262
  %v264 = vpop.f32.mrb[0].mxu0
  %v265 = vpop.f32.mrb[0].mxu0
  %v266 = vpop.f32.mrb[0].mxu0
  %267 = vdwg.mxu0
  %vm268 = vcmp.ge.f32.partialorder %v263, 0.0
  %v269 = vmul.f32 %v263, 0.2
  %v270 = vsel %vm268, %v263, %v269
  %v271 = vld [vmem:[%s3] sm:$0x1]
  %v273 = vlaneseq
  %v274 = vshrl.u32 %v273, 7
  %v275 = vsub.s32 0, %v274
  %v276 = vrot.slane %v271, %v275
  %v278 = vmul.f32 %v270, %v276
  %v279 = vld [vmem:[%s4] sm:$0x1]
  %v281 = vlaneseq
  %v282 = vshrl.u32 %v281, 7
  %v283 = vsub.s32 0, %v282
  %v284 = vrot.slane %v279, %v283
  %v286 = vadd.f32 %v278, %v284
  %v287 = vpack.c.bf16 %v286, %v286
  %288 = vst [vmem:[%s5] sm:$0xf] %v287
  // Predicated region
  $region22: #{discriminator_forward.7} parent=0 // pred_check
    _
  $region23: #{discriminator_forward.7} parent=0 // pred_check_branch
    %290 = sbr.rel (0) target = $region25
  $region24: #{discriminator_forward.7} parent=0 // pred_region
    _
  $region25: #{discriminator_forward.7} parent=0 // pred_fallthru
    _
  // Predicated region
  $region26: #{discriminator_forward.7} parent=0 // pred_check
    _
  $region27: #{discriminator_forward.7} parent=0 // pred_check_branch
    %292 = sbr.rel (0) target = $region29
  $region28: #{discriminator_forward.7} parent=0 // pred_region
    _
  $region29: #{discriminator_forward.7} parent=0 // pred_fallthru
    _

// kernel: discriminator_forward.8
$region0: #{discriminator_forward.8}
  #allocation0 [shape = 'u32[]', space=smem, size = 0x4, offset = 0x4, fixed_abs, tag = 'smem constant byte address 0x4 - core index']
  #allocation1 [shape = 'u32[144,128]{1,0:T(1,128)}', space=vmem, size = 0x12000, scoped, tag = 'internal scratch']
  %s0 = inlined_call_operand.vmem [shape: bf16[8,576], index: 0, kind: input, shape index: {}]
  %s1 = inlined_call_operand.vmem [shape: bf16[576,128], index: 1, kind: input, shape index: {}]
  %s2 = inlined_call_operand.vmem [shape: f32[1,128], index: 2, kind: input, shape index: {}]
  %s3 = inlined_call_operand.vmem [shape: f32[1,128], index: 3, kind: input, shape index: {}]
  %s4 = inlined_call_operand.vmem [shape: f32[1,128], index: 4, kind: input, shape index: {}]
  %s5 = inlined_call_operand.vmem [shape: bf16[8,128], index: 5, kind: output, shape index: {}]
  %s6 = sld [smem:[#allocation0]]
  $region30: #{discriminator_forward.8} parent=0
    _
  %s8 = ssub.s32 1, %s6
  %s9 = scalar_select 0, %s8, %s6
  // Predicated region
  $region2: #{discriminator_forward.8} parent=0 // pred_check
    _
  $region3: #{discriminator_forward.8} parent=0 // pred_check_branch
    %11 = sbr.rel (0) target = $region5
  $region4: #{discriminator_forward.8} parent=0 // pred_region
    _
  $region5: #{discriminator_forward.8} parent=0 // pred_fallthru
    _
  // Predicated region
  $region6: #{discriminator_forward.8} parent=0 // pred_check
    _
  $region7: #{discriminator_forward.8} parent=0 // pred_check_branch
    %13 = sbr.rel (0) target = $region9
  $region8: #{discriminator_forward.8} parent=0 // pred_region
    _
  $region9: #{discriminator_forward.8} parent=0 // pred_fallthru
    _
  // Predicated region
  $region10: #{discriminator_forward.8} parent=0 // pred_check
    _
  $region11: #{discriminator_forward.8} parent=0 // pred_check_branch
    %15 = sbr.rel (0) target = $region13
  $region12: #{discriminator_forward.8} parent=0 // pred_region
    _
  $region13: #{discriminator_forward.8} parent=0 // pred_fallthru
    _
  // Predicated region
  $region14: #{discriminator_forward.8} parent=0 // pred_check
    _
  $region15: #{discriminator_forward.8} parent=0 // pred_check_branch
    %17 = sbr.rel (0) target = $region17
  $region16: #{discriminator_forward.8} parent=0 // pred_region
    _
  $region17: #{discriminator_forward.8} parent=0 // pred_fallthru
    _
  // Predicated region
  $region18: #{discriminator_forward.8} parent=0 // pred_check
    _
  $region19: #{discriminator_forward.8} parent=0 // pred_check_branch
    %19 = sbr.rel (0) target = $region21
  $region20: #{discriminator_forward.8} parent=0 // pred_region
    _
  $region21: #{discriminator_forward.8} parent=0 // pred_fallthru
    _
  %v21 = vld [vmem:[%s0] sm:$0xff]
  %v22 = vld [vmem:[%s0 + $0x8] sm:$0xff]
  %v23 = vld [vmem:[%s0 + $0x10] sm:$0xf]
  %v24 = vld [vmem:[%s1] sm:$0xf]
  %v25 = vld [vmem:[%s1 + $0x4] sm:$0xf]
  %v26 = vld [vmem:[%s1 + $0x8] sm:$0xf]
  %v27 = vld [vmem:[%s1 + $0xc] sm:$0xf]
  %v28 = vld [vmem:[%s1 + $0x10] sm:$0xf]
  %v29 = vld [vmem:[%s1 + $0x14] sm:$0xf]
  %v30 = vld [vmem:[%s1 + $0x18] sm:$0xf]
  %v31 = vld [vmem:[%s1 + $0x1c] sm:$0xf]
  %v32 = vld [vmem:[%s1 + $0x20] sm:$0xf]
  %v33 = vld [vmem:[%s1 + $0x24] sm:$0xf]
  %v34 = vld [vmem:[%s1 + $0x28] sm:$0xf]
  %v35 = vld [vmem:[%s1 + $0x2c] sm:$0xf]
  %v36 = vld [vmem:[%s1 + $0x30] sm:$0xf]
  %v37 = vld [vmem:[%s1 + $0x34] sm:$0xf]
  %v38 = vld [vmem:[%s1 + $0x38] sm:$0xf]
  %v39 = vld [vmem:[%s1 + $0x3c] sm:$0xf]
  %v40 = vld [vmem:[%s1 + $0x40] sm:$0xf]
  %v41 = vld [vmem:[%s1 + $0x44] sm:$0xf]
  %v42 = vld [vmem:[%s1 + $0x48] sm:$0xf]
  %v43 = vld [vmem:[%s1 + $0x4c] sm:$0xf]
  %v44 = vld [vmem:[%s1 + $0x50] sm:$0xf]
  %v45 = vld [vmem:[%s1 + $0x54] sm:$0xf]
  %v46 = vld [vmem:[%s1 + $0x58] sm:$0xf]
  %v47 = vld [vmem:[%s1 + $0x5c] sm:$0xf]
  %v48 = vld [vmem:[%s1 + $0x60] sm:$0xf]
  %v49 = vld [vmem:[%s1 + $0x64] sm:$0xf]
  %v50 = vld [vmem:[%s1 + $0x68] sm:$0xf]
  %v51 = vld [vmem:[%s1 + $0x6c] sm:$0xf]
  %v52 = vld [vmem:[%s1 + $0x70] sm:$0xf]
  %v53 = vld [vmem:[%s1 + $0x74] sm:$0xf]
  %v54 = vld [vmem:[%s1 + $0x78] sm:$0xf]
  %v55 = vld [vmem:[%s1 + $0x7c] sm:$0xf]
  %v56 = vld [vmem:[%s1 + $0x80] sm:$0xf]
  %v57 = vld [vmem:[%s1 + $0x84] sm:$0xf]
  %v58 = vld [vmem:[%s1 + $0x88] sm:$0xf]
  %v59 = vld [vmem:[%s1 + $0x8c] sm:$0xf]
  %v60 = vld [vmem:[%s1 + $0x90] sm:$0xf]
  %v61 = vld [vmem:[%s1 + $0x94] sm:$0xf]
  %v62 = vld [vmem:[%s1 + $0x98] sm:$0xf]
  %v63 = vld [vmem:[%s1 + $0x9c] sm:$0xf]
  %v64 = vld [vmem:[%s1 + $0xa0] sm:$0xf]
  %v65 = vld [vmem:[%s1 + $0xa4] sm:$0xf]
  %v66 = vld [vmem:[%s1 + $0xa8] sm:$0xf]
  %v67 = vld [vmem:[%s1 + $0xac] sm:$0xf]
  %v68 = vld [vmem:[%s1 + $0xb0] sm:$0xf]
  %v69 = vld [vmem:[%s1 + $0xb4] sm:$0xf]
  %v70 = vld [vmem:[%s1 + $0xb8] sm:$0xf]
  %v71 = vld [vmem:[%s1 + $0xbc] sm:$0xf]
  %v72 = vld [vmem:[%s1 + $0xc0] sm:$0xf]
  %v73 = vld [vmem:[%s1 + $0xc4] sm:$0xf]
  %v74 = vld [vmem:[%s1 + $0xc8] sm:$0xf]
  %v75 = vld [vmem:[%s1 + $0xcc] sm:$0xf]
  %v76 = vld [vmem:[%s1 + $0xd0] sm:$0xf]
  %v77 = vld [vmem:[%s1 + $0xd4] sm:$0xf]
  %v78 = vld [vmem:[%s1 + $0xd8] sm:$0xf]
  %v79 = vld [vmem:[%s1 + $0xdc] sm:$0xf]
  %v80 = vld [vmem:[%s1 + $0xe0] sm:$0xf]
  %v81 = vld [vmem:[%s1 + $0xe4] sm:$0xf]
  %v82 = vld [vmem:[%s1 + $0xe8] sm:$0xf]
  %v83 = vld [vmem:[%s1 + $0xec] sm:$0xf]
  %v84 = vld [vmem:[%s1 + $0xf0] sm:$0xf]
  %v85 = vld [vmem:[%s1 + $0xf4] sm:$0xf]
  %v86 = vld [vmem:[%s1 + $0xf8] sm:$0xf]
  %v87 = vld [vmem:[%s1 + $0xfc] sm:$0xf]
  %v88 = vld [vmem:[%s1 + $0x100] sm:$0xf]
  %v89 = vld [vmem:[%s1 + $0x104] sm:$0xf]
  %v90 = vld [vmem:[%s1 + $0x108] sm:$0xf]
  %v91 = vld [vmem:[%s1 + $0x10c] sm:$0xf]
  %v92 = vld [vmem:[%s1 + $0x110] sm:$0xf]
  %v93 = vld [vmem:[%s1 + $0x114] sm:$0xf]
  %v94 = vld [vmem:[%s1 + $0x118] sm:$0xf]
  %v95 = vld [vmem:[%s1 + $0x11c] sm:$0xf]
  %v96 = vld [vmem:[%s2] sm:$0x1]
  %v98 = vlaneseq
  %v99 = vshrl.u32 %v98, 7
  %v100 = vsub.s32 0, %v99
  %v101 = vrot.slane %v96, %v100
  %v106 = vunpack.c.l.b16 %v21
  %v107 = vunpack.c.h.b16 %v21
  %v108 = vunpack.c.l.b16 %v22
  %v109 = vunpack.c.h.b16 %v22
  %v110 = vunpack.c.l.b16 %v23
  %v111 = vpack.c.b16 %v106, %v106
  %v112 = vpack.c.b16 %v107, %v107
  %v113 = vpack.c.b16 %v108, %v108
  %v114 = vpack.c.b16 %v109, %v109
  %v115 = vpack.c.b16 %v110, %v110
  %v192 = vunpack.c.l.b16 %v24
  %v193 = vunpack.c.l.b16 %v25
  %v194 = vunpack.c.l.b16 %v26
  %v195 = vunpack.c.l.b16 %v27
  %v196 = vunpack.c.l.b16 %v28
  %v197 = vunpack.c.l.b16 %v29
  %v198 = vunpack.c.l.b16 %v30
  %v199 = vunpack.c.l.b16 %v31
  %v200 = vunpack.c.l.b16 %v32
  %v201 = vunpack.c.l.b16 %v33
  %v202 = vunpack.c.l.b16 %v34
  %v203 = vunpack.c.l.b16 %v35
  %v204 = vunpack.c.l.b16 %v36
  %v205 = vunpack.c.l.b16 %v37
  %v206 = vunpack.c.l.b16 %v38
  %v207 = vunpack.c.l.b16 %v39
  %v208 = vunpack.c.l.b16 %v40
  %v209 = vunpack.c.l.b16 %v41
  %v210 = vunpack.c.l.b16 %v42
  %v211 = vunpack.c.l.b16 %v43
  %v212 = vunpack.c.l.b16 %v44
  %v213 = vunpack.c.l.b16 %v45
  %v214 = vunpack.c.l.b16 %v46
  %v215 = vunpack.c.l.b16 %v47
  %v216 = vunpack.c.l.b16 %v48
  %v217 = vunpack.c.l.b16 %v49
  %v218 = vunpack.c.l.b16 %v50
  %v219 = vunpack.c.l.b16 %v51
  %v220 = vunpack.c.l.b16 %v52
  %v221 = vunpack.c.l.b16 %v53
  %v222 = vunpack.c.l.b16 %v54
  %v223 = vunpack.c.l.b16 %v55
  %v224 = vunpack.c.l.b16 %v56
  %v225 = vunpack.c.l.b16 %v57
  %v226 = vunpack.c.l.b16 %v58
  %v227 = vunpack.c.l.b16 %v59
  %v228 = vunpack.c.l.b16 %v60
  %v229 = vunpack.c.l.b16 %v61
  %v230 = vunpack.c.l.b16 %v62
  %v231 = vunpack.c.l.b16 %v63
  %v232 = vunpack.c.l.b16 %v64
  %v233 = vunpack.c.l.b16 %v65
  %v234 = vunpack.c.l.b16 %v66
  %v235 = vunpack.c.l.b16 %v67
  %v236 = vunpack.c.l.b16 %v68
  %v237 = vunpack.c.l.b16 %v69
  %v238 = vunpack.c.l.b16 %v70
  %v239 = vunpack.c.l.b16 %v71
  %v240 = vunpack.c.l.b16 %v72
  %v241 = vunpack.c.l.b16 %v73
  %v242 = vunpack.c.l.b16 %v74
  %v243 = vunpack.c.l.b16 %v75
  %v244 = vunpack.c.l.b16 %v76
  %v245 = vunpack.c.l.b16 %v77
  %v246 = vunpack.c.l.b16 %v78
  %v247 = vunpack.c.l.b16 %v79
  %v248 = vunpack.c.l.b16 %v80
  %v249 = vunpack.c.l.b16 %v81
  %v250 = vunpack.c.l.b16 %v82
  %v251 = vunpack.c.l.b16 %v83
  %v252 = vunpack.c.l.b16 %v84
  %v253 = vunpack.c.l.b16 %v85
  %v254 = vunpack.c.l.b16 %v86
  %v255 = vunpack.c.l.b16 %v87
  %v256 = vunpack.c.l.b16 %v88
  %v257 = vunpack.c.l.b16 %v89
  %v258 = vunpack.c.l.b16 %v90
  %v259 = vunpack.c.l.b16 %v91
  %v260 = vunpack.c.l.b16 %v92
  %v261 = vunpack.c.l.b16 %v93
  %v262 = vunpack.c.l.b16 %v94
  %v263 = vunpack.c.l.b16 %v95
  %v264 = vpack.c.b16 %v193, %v192
  %v265 = vpack.c.b16 %v195, %v194
  %v266 = vpack.c.b16 %v197, %v196
  %v267 = vpack.c.b16 %v199, %v198
  %v268 = vpack.c.b16 %v201, %v200
  %v269 = vpack.c.b16 %v203, %v202
  %v270 = vpack.c.b16 %v205, %v204
  %v271 = vpack.c.b16 %v207, %v206
  %v272 = vpack.c.b16 %v209, %v208
  %v273 = vpack.c.b16 %v211, %v210
  %v274 = vpack.c.b16 %v213, %v212
  %v275 = vpack.c.b16 %v215, %v214
  %v276 = vpack.c.b16 %v217, %v216
  %v277 = vpack.c.b16 %v219, %v218
  %v278 = vpack.c.b16 %v221, %v220
  %v279 = vpack.c.b16 %v223, %v222
  %v280 = vpack.c.b16 %v225, %v224
  %v281 = vpack.c.b16 %v227, %v226
  %v282 = vpack.c.b16 %v229, %v228
  %v283 = vpack.c.b16 %v231, %v230
  %v284 = vpack.c.b16 %v233, %v232
  %v285 = vpack.c.b16 %v235, %v234
  %v286 = vpack.c.b16 %v237, %v236
  %v287 = vpack.c.b16 %v239, %v238
  %v288 = vpack.c.b16 %v241, %v240
  %v289 = vpack.c.b16 %v243, %v242
  %v290 = vpack.c.b16 %v245, %v244
  %v291 = vpack.c.b16 %v247, %v246
  %v292 = vpack.c.b16 %v249, %v248
  %v293 = vpack.c.b16 %v251, %v250
  %v294 = vpack.c.b16 %v253, %v252
  %v295 = vpack.c.b16 %v255, %v254
  %v296 = vpack.c.b16 %v257, %v256
  %v297 = vpack.c.b16 %v259, %v258
  %v298 = vpack.c.b16 %v261, %v260
  %v299 = vpack.c.b16 %v263, %v262
  %vm336 = vcmask 523264
  %v338 = vsel %vm336, %v115, 0
  %340 = vmatprep.subr.bf16.mxu0 0
  %341 = vmatpush1.bf16.msra.mxu0 %v264
  %342 = vmatprep.subr.bf16.mxu0 0
  %343 = vmatpush1.bf16.msra.mxu0 %v265
  %344 = vmatprep.subr.bf16.mxu0 0
  %345 = vmatpush1.bf16.msra.mxu0 %v266
  %346 = vmatprep.subr.bf16.mxu0 0
  %347 = vmatpush1.bf16.msra.mxu0 %v267
  %348 = vmatprep.subr.bf16.mxu0 0
  %349 = vmatpush1.bf16.msra.mxu0 %v268
  %350 = vmatprep.subr.bf16.mxu0 0
  %351 = vmatpush1.bf16.msra.mxu0 %v269
  %352 = vmatprep.subr.bf16.mxu0 0
  %353 = vmatpush1.bf16.msra.mxu0 %v270
  %354 = vmatprep.subr.bf16.mxu0 0
  %355 = vmatpush1.bf16.msra.mxu0 %v271
  %356 = vmatprep.subr.bf16.mxu0 0
  %357 = vmatpush1.bf16.msra.mxu0 %v272
  %358 = vmatprep.subr.bf16.mxu0 0
  %359 = vmatpush1.bf16.msra.mxu0 %v273
  %360 = vmatprep.subr.bf16.mxu0 0
  %361 = vmatpush1.bf16.msra.mxu0 %v274
  %362 = vmatprep.subr.bf16.mxu0 0
  %363 = vmatpush1.bf16.msra.mxu0 %v275
  %364 = vmatprep.subr.bf16.mxu0 0
  %365 = vmatpush1.bf16.msra.mxu0 %v276
  %366 = vmatprep.subr.bf16.mxu0 0
  %367 = vmatpush1.bf16.msra.mxu0 %v277
  %368 = vmatprep.subr.bf16.mxu0 0
  %369 = vmatpush1.bf16.msra.mxu0 %v278
  %370 = vmatprep.subr.bf16.mxu0 0
  %371 = vmatpush1.bf16.msra.mxu0 %v279
  %372 = vmatprep.mubr.bf16.mxu0 %v112
  %373 = vmatmul.mubr.bf16.gmra.mrb[0].mxu0 %v111
  %v374 = vpop.f32.mrb[0].mxu0
  %v375 = vadd.f32 %v101, %v374
  %v376 = vpop.f32.mrb[0].mxu0
  %v377 = vpop.f32.mrb[0].mxu0
  %v378 = vpop.f32.mrb[0].mxu0
  %379 = vdwg.mxu0
  %380 = vmatprep.subr.bf16.mxu0 0
  %381 = vmatpush1.bf16.msra.mxu0 %v280
  %382 = vmatprep.subr.bf16.mxu0 0
  %383 = vmatpush1.bf16.msra.mxu0 %v281
  %384 = vmatprep.subr.bf16.mxu0 0
  %385 = vmatpush1.bf16.msra.mxu0 %v282
  %386 = vmatprep.subr.bf16.mxu0 0
  %387 = vmatpush1.bf16.msra.mxu0 %v283
  %388 = vmatprep.subr.bf16.mxu0 0
  %389 = vmatpush1.bf16.msra.mxu0 %v284
  %390 = vmatprep.subr.bf16.mxu0 0
  %391 = vmatpush1.bf16.msra.mxu0 %v285
  %392 = vmatprep.subr.bf16.mxu0 0
  %393 = vmatpush1.bf16.msra.mxu0 %v286
  %394 = vmatprep.subr.bf16.mxu0 0
  %395 = vmatpush1.bf16.msra.mxu0 %v287
  %396 = vmatprep.subr.bf16.mxu0 0
  %397 = vmatpush1.bf16.msra.mxu0 %v288
  %398 = vmatprep.subr.bf16.mxu0 0
  %399 = vmatpush1.bf16.msra.mxu0 %v289
  %400 = vmatprep.subr.bf16.mxu0 0
  %401 = vmatpush1.bf16.msra.mxu0 %v290
  %402 = vmatprep.subr.bf16.mxu0 0
  %403 = vmatpush1.bf16.msra.mxu0 %v291
  %404 = vmatprep.subr.bf16.mxu0 0
  %405 = vmatpush1.bf16.msra.mxu0 %v292
  %406 = vmatprep.subr.bf16.mxu0 0
  %407 = vmatpush1.bf16.msra.mxu0 %v293
  %408 = vmatprep.subr.bf16.mxu0 0
  %409 = vmatpush1.bf16.msra.mxu0 %v294
  %410 = vmatprep.subr.bf16.mxu0 0
  %411 = vmatpush1.bf16.msra.mxu0 %v295
  %412 = vmatprep.mubr.bf16.mxu0 %v114
  %413 = vmatmul.mubr.bf16.gmra.mrb[0].mxu0 %v113
  %v414 = vpop.f32.mrb[0].mxu0
  %v415 = vadd.f32 %v375, %v414
  %v416 = vpop.f32.mrb[0].mxu0
  %v417 = vpop.f32.mrb[0].mxu0
  %v418 = vpop.f32.mrb[0].mxu0
  %419 = vdwg.mxu0
  %420 = vmatprep.subr.bf16.mxu0 0
  %421 = vmatpush1.bf16.msra.mxu0 %v296
  %422 = vmatprep.subr.bf16.mxu0 0
  %423 = vmatpush1.bf16.msra.mxu0 %v297
  %424 = vmatprep.subr.bf16.mxu0 0
  %425 = vmatpush1.bf16.msra.mxu0 %v298
  %426 = vmatprep.subr.bf16.mxu0 0
  %427 = vmatpush1.bf16.msra.mxu0 %v299
  %428 = vmatprep.subr.bf16.mxu0 0
  %429 = vmatpush1.bf16.msra.mxu0 0
  %430 = vmatprep.subr.bf16.mxu0 0
  %431 = vmatpush1.bf16.msra.mxu0 0
  %432 = vmatprep.subr.bf16.mxu0 0
  %433 = vmatpush1.bf16.msra.mxu0 0
  %434 = vmatprep.subr.bf16.mxu0 0
  %435 = vmatpush1.bf16.msra.mxu0 0
  %436 = vmatprep.subr.bf16.mxu0 0
  %437 = vmatpush1.bf16.msra.mxu0 0
  %438 = vmatprep.subr.bf16.mxu0 0
  %439 = vmatpush1.bf16.msra.mxu0 0
  %440 = vmatprep.subr.bf16.mxu0 0
  %441 = vmatpush1.bf16.msra.mxu0 0
  %442 = vmatprep.subr.bf16.mxu0 0
  %443 = vmatpush1.bf16.msra.mxu0 0
  %444 = vmatprep.subr.bf16.mxu0 0
  %445 = vmatpush1.bf16.msra.mxu0 0
  %446 = vmatprep.subr.bf16.mxu0 0
  %447 = vmatpush1.bf16.msra.mxu0 0
  %448 = vmatprep.subr.bf16.mxu0 0
  %449 = vmatpush1.bf16.msra.mxu0 0
  %450 = vmatprep.subr.bf16.mxu0 0
  %451 = vmatpush1.bf16.msra.mxu0 0
  %452 = vmatprep.mubr.bf16.mxu0 0
  %453 = vmatmul.mubr.bf16.gmra.mrb[0].mxu0 %v338
  %v454 = vpop.f32.mrb[0].mxu0
  %v455 = vadd.f32 %v415, %v454
  %v456 = vpop.f32.mrb[0].mxu0
  %v457 = vpop.f32.mrb[0].mxu0
  %v458 = vpop.f32.mrb[0].mxu0
  %459 = vdwg.mxu0
  %vm460 = vcmp.ge.f32.partialorder %v455, 0.0
  %v461 = vmul.f32 %v455, 0.2
  %v462 = vsel %vm460, %v455, %v461
  %v463 = vld [vmem:[%s3] sm:$0x1]
  %v465 = vlaneseq
  %v466 = vshrl.u32 %v465, 7
  %v467 = vsub.s32 0, %v466
  %v468 = vrot.slane %v463, %v467
  %v470 = vmul.f32 %v462, %v468
  %v471 = vld [vmem:[%s4] sm:$0x1]
  %v473 = vlaneseq
  %v474 = vshrl.u32 %v473, 7
  %v475 = vsub.s32 0, %v474
  %v476 = vrot.slane %v471, %v475
  %v478 = vadd.f32 %v470, %v476
  %v479 = vpack.c.bf16 %v478, %v478
  %480 = vst [vmem:[%s5] sm:$0xf] %v479
  // Predicated region
  $region22: #{discriminator_forward.8} parent=0 // pred_check
    _
  $region23: #{discriminator_forward.8} parent=0 // pred_check_branch
    %482 = sbr.rel (0) target = $region25
  $region24: #{discriminator_forward.8} parent=0 // pred_region
    _
  $region25: #{discriminator_forward.8} parent=0 // pred_fallthru
    _
  // Predicated region
  $region26: #{discriminator_forward.8} parent=0 // pred_check
    _
  $region27: #{discriminator_forward.8} parent=0 // pred_check_branch
    %484 = sbr.rel (0) target = $region29
  $region28: #{discriminator_forward.8} parent=0 // pred_region
    _
  $region29: #{discriminator_forward.8} parent=0 // pred_fallthru
    _

// kernel: discriminator_forward.9
$region0: #{discriminator_forward.9}
  #allocation0 [shape = 'u32[]', space=smem, size = 0x4, offset = 0x4, fixed_abs, tag = 'smem constant byte address 0x4 - core index']
  #allocation1 [shape = 'u32[144,128]{1,0:T(1,128)}', space=vmem, size = 0x12000, scoped, tag = 'internal scratch']
  %s0 = inlined_call_operand.vmem [shape: bf16[8,128], index: 0, kind: input, shape index: {}]
  %s1 = inlined_call_operand.vmem [shape: bf16[128,128], index: 1, kind: input, shape index: {}]
  %s2 = inlined_call_operand.vmem [shape: f32[1,128], index: 2, kind: input, shape index: {}]
  %s3 = inlined_call_operand.vmem [shape: f32[8,128], index: 3, kind: output, shape index: {}]
  %s4 = sld [smem:[#allocation0]]
  $region22: #{discriminator_forward.9} parent=0
    _
  %s6 = ssub.s32 1, %s4
  %s7 = scalar_select 0, %s6, %s4
  // Predicated region
  $region2: #{discriminator_forward.9} parent=0 // pred_check
    _
  $region3: #{discriminator_forward.9} parent=0 // pred_check_branch
    %9 = sbr.rel (0) target = $region5
  $region4: #{discriminator_forward.9} parent=0 // pred_region
    _
  $region5: #{discriminator_forward.9} parent=0 // pred_fallthru
    _
  // Predicated region
  $region6: #{discriminator_forward.9} parent=0 // pred_check
    _
  $region7: #{discriminator_forward.9} parent=0 // pred_check_branch
    %11 = sbr.rel (0) target = $region9
  $region8: #{discriminator_forward.9} parent=0 // pred_region
    _
  $region9: #{discriminator_forward.9} parent=0 // pred_fallthru
    _
  // Predicated region
  $region10: #{discriminator_forward.9} parent=0 // pred_check
    _
  $region11: #{discriminator_forward.9} parent=0 // pred_check_branch
    %13 = sbr.rel (0) target = $region13
  $region12: #{discriminator_forward.9} parent=0 // pred_region
    _
  $region13: #{discriminator_forward.9} parent=0 // pred_fallthru
    _
  %v15 = vld [vmem:[%s0] sm:$0xf]
  %v16 = vld [vmem:[%s1] sm:$0xf]
  %v17 = vld [vmem:[%s1 + $0x4] sm:$0xf]
  %v18 = vld [vmem:[%s1 + $0x8] sm:$0xf]
  %v19 = vld [vmem:[%s1 + $0xc] sm:$0xf]
  %v20 = vld [vmem:[%s1 + $0x10] sm:$0xf]
  %v21 = vld [vmem:[%s1 + $0x14] sm:$0xf]
  %v22 = vld [vmem:[%s1 + $0x18] sm:$0xf]
  %v23 = vld [vmem:[%s1 + $0x1c] sm:$0xf]
  %v24 = vld [vmem:[%s1 + $0x20] sm:$0xf]
  %v25 = vld [vmem:[%s1 + $0x24] sm:$0xf]
  %v26 = vld [vmem:[%s1 + $0x28] sm:$0xf]
  %v27 = vld [vmem:[%s1 + $0x2c] sm:$0xf]
  %v28 = vld [vmem:[%s1 + $0x30] sm:$0xf]
  %v29 = vld [vmem:[%s1 + $0x34] sm:$0xf]
  %v30 = vld [vmem:[%s1 + $0x38] sm:$0xf]
  %v31 = vld [vmem:[%s1 + $0x3c] sm:$0xf]
  %v32 = vld [vmem:[%s2] sm:$0x1]
  %v34 = vlaneseq
  %v35 = vshrl.u32 %v34, 7
  %v36 = vsub.s32 0, %v35
  %v37 = vrot.slane %v32, %v36
  %v55 = vunpack.c.l.b16 %v16
  %v56 = vunpack.c.l.b16 %v17
  %v57 = vunpack.c.l.b16 %v18
  %v58 = vunpack.c.l.b16 %v19
  %v59 = vunpack.c.l.b16 %v20
  %v60 = vunpack.c.l.b16 %v21
  %v61 = vunpack.c.l.b16 %v22
  %v62 = vunpack.c.l.b16 %v23
  %v63 = vunpack.c.l.b16 %v24
  %v64 = vunpack.c.l.b16 %v25
  %v65 = vunpack.c.l.b16 %v26
  %v66 = vunpack.c.l.b16 %v27
  %v67 = vunpack.c.l.b16 %v28
  %v68 = vunpack.c.l.b16 %v29
  %v69 = vunpack.c.l.b16 %v30
  %v70 = vunpack.c.l.b16 %v31
  %v71 = vpack.c.b16 %v56, %v55
  %v72 = vpack.c.b16 %v58, %v57
  %v73 = vpack.c.b16 %v60, %v59
  %v74 = vpack.c.b16 %v62, %v61
  %v75 = vpack.c.b16 %v64, %v63
  %v76 = vpack.c.b16 %v66, %v65
  %v77 = vpack.c.b16 %v68, %v67
  %v78 = vpack.c.b16 %v70, %v69
  %87 = vmatprep.subr.bf16.mxu0 0
  %88 = vmatpush1.bf16.msra.mxu0 %v71
  %89 = vmatprep.subr.bf16.mxu0 0
  %90 = vmatpush1.bf16.msra.mxu0 %v72
  %91 = vmatprep.subr.bf16.mxu0 0
  %92 = vmatpush1.bf16.msra.mxu0 %v73
  %93 = vmatprep.subr.bf16.mxu0 0
  %94 = vmatpush1.bf16.msra.mxu0 %v74
  %95 = vmatprep.subr.bf16.mxu0 0
  %96 = vmatpush1.bf16.msra.mxu0 %v75
  %97 = vmatprep.subr.bf16.mxu0 0
  %98 = vmatpush1.bf16.msra.mxu0 %v76
  %99 = vmatprep.subr.bf16.mxu0 0
  %100 = vmatpush1.bf16.msra.mxu0 %v77
  %101 = vmatprep.subr.bf16.mxu0 0
  %102 = vmatpush1.bf16.msra.mxu0 %v78
  %103 = vmatprep.subr.bf16.mxu0 0
  %104 = vmatpush1.bf16.msra.mxu0 0
  %105 = vmatprep.subr.bf16.mxu0 0
  %106 = vmatpush1.bf16.msra.mxu0 0
  %107 = vmatprep.subr.bf16.mxu0 0
  %108 = vmatpush1.bf16.msra.mxu0 0
  %109 = vmatprep.subr.bf16.mxu0 0
  %110 = vmatpush1.bf16.msra.mxu0 0
  %111 = vmatprep.subr.bf16.mxu0 0
  %112 = vmatpush1.bf16.msra.mxu0 0
  %113 = vmatprep.subr.bf16.mxu0 0
  %114 = vmatpush1.bf16.msra.mxu0 0
  %115 = vmatprep.subr.bf16.mxu0 0
  %116 = vmatpush1.bf16.msra.mxu0 0
  %117 = vmatprep.subr.bf16.mxu0 0
  %118 = vmatpush1.bf16.msra.mxu0 0
  %119 = vmatprep.mubr.bf16.mxu0 0
  %120 = vmatmul.mubr.bf16.gmra.mrb[0].mxu0 %v15
  %v121 = vpop.f32.mrb[0].mxu0
  %v122 = vadd.f32 %v37, %v121
  %v123 = vpop.f32.mrb[0].mxu0
  %v124 = vpop.f32.mrb[0].mxu0
  %v125 = vpop.f32.mrb[0].mxu0
  %126 = vdwg.mxu0
  %v127 = vlaneseq
  %v128 = vand.u32 %v127, 127
  %vm129 = vcmp.eq.s32.totalorder %v128, 0
  %vm130 = vcmp.ge.s32.totalorder %v128, 1
  %vm131 = vcmp.lt.s32.totalorder %v128, 6
  %vm132 = vmand %vm130, %vm131
  %v133 = vsub.f32 0.0, %v122
  %v134 = vmul.f32 %v133, 1.442695
  %v135 = vpow.pop %v134
  %v136 = vadd.f32 %v135, 1.0
  %v137 = vrcp.pop %v136
  %v138 = vmul.f32 1.0, %v137
  %v139 = vsel %vm132, %v122, -inf
  %140 = vmax.xlane.f32.xlu0 %v139
  %v141 = vpop.xlane.xlu0 %140
  %v142 = vsub.f32 %v122, %v141
  %v143 = vmul.f32 %v142, 1.442695
  %v144 = vpow.pop %v143
  %v145 = vsel %vm132, %v144, 0.0
  %146 = vadd.xlane.f32.xlu0 %v145
  %v147 = vpop.xlane.xlu0 %146
  %v148 = vrcp.pop %v147
  %v149 = vmul.f32 %v145, %v148
  %v150 = vsel %vm132, %v149, 0.0
  %v151 = vsel %vm129, %v138, %v150
  %152 = vst [vmem:[%s3] sm:$0xff] %v151
  // Predicated region
  $region14: #{discriminator_forward.9} parent=0 // pred_check
    _
  $region15: #{discriminator_forward.9} parent=0 // pred_check_branch
    %154 = sbr.rel (0) target = $region17
  $region16: #{discriminator_forward.9} parent=0 // pred_region
    _
  $region17: #{discriminator_forward.9} parent=0 // pred_fallthru
    _
  // Predicated region
  $region18: #{discriminator_forward.9} parent=0 // pred_check
    _
  $region19: #{discriminator_forward.9} parent=0 // pred_check_branch
    %156 = sbr.rel (0) target = $region21
  $region20: #{discriminator_forward.9} parent=0 // pred_region
    _
  $region21: #{discriminator_forward.9} parent=0 // pred_fallthru
    _

</llo_original>
